<compile_context>
chip_gen: v5e
topology: v5e:2x2
jax: 0.10.0
libtpu: 0.0.40
codegen_flags: <defaults>
</compile_context>

<pallas_src>
import functools

import jax
import jax.numpy as jnp
from jax import lax
from jax.experimental import pallas as pl
from jax.experimental.pallas import tpu as pltpu


def _tokenizer_kernel(x_ref, w_ref, b_ref, o_ref, *, num_channels, num_points,
                      out_cols_per_channel):
    """One grid step = one tile of batch rows.

    x_ref: (TB, C*P)    f32  un-permuted, channel-major flattened input rows
    w_ref: (P, Tc*E)    f32  permutation-folded, token-scattered weight (resident)
    b_ref: (1, Tc*E)    f32  bias tiled over the Tc tokens of a channel (resident)
    o_ref: (TB, S*E)    f32  lane-dense output slab (token-major per row)
    """
    P, W = num_points, out_cols_per_channel
    for c in range(num_channels):
        # 256-deep contraction, 512-wide result: a good shape for the 256x256
        # MXUs of v6e/v7x (and fine on v5e's 128x128 arrays).
        y = jnp.dot(x_ref[:, c * P:(c + 1) * P], w_ref[...],
                    preferred_element_type=jnp.float32)          # (TB, Tc*E)
        o_ref[:, c * W:(c + 1) * W] = (y + b_ref[...]).astype(o_ref.dtype)


def pallas_linear_tokenizer(x, weight, bias, perm, *, seq_len, block_rows=None):
    """x: (B, 6, P) f32, weight: (E, K) f32 (PyTorch layout), bias: (E,) f32,
    perm: (P,) int -> (B, seq_len, E) f32."""
    B, C, P = x.shape
    L = C * P
    assert L % seq_len == 0, "6 * num_points must be divisible by seq_len"
    K = L // seq_len                      # input_size
    E, Kw = weight.shape
    assert Kw == K
    # TODO(synk): general seq_len % 6 != 0 case (tokens straddling channel
    # boundaries) would need the un-folded gather path; not needed for this spec.
    assert seq_len % C == 0, "weight-fold path requires seq_len % 6 == 0"
    Tc = seq_len // C                     # tokens per channel (== P // K)

    perm = perm.astype(jnp.int32)

    # --- Fold permutation + token split into the weight (tiny one-time cost) ---
    # Block-diagonal token weight: w_blk[j*K + k, j*E + e] = W[e, k]
    w_blk = jnp.kron(jnp.eye(Tc, dtype=weight.dtype), weight.T)        # (P, Tc*E)
    # Scatter rows through the permutation: w_comb[perm[q]] = w_blk[q], so that
    #   out[b, c*Tc + j, e] = sum_p x[b, c, p] * w_comb[p, j*E + e] + bias[e]
    # exactly matches x[:, :, perm].view(B,-1,K) @ W.T + bias.
    w_comb = jnp.zeros((P, Tc * E), weight.dtype).at[perm].set(w_blk)
    bias_tiled = jnp.tile(bias, (Tc,)).reshape(1, Tc * E)

    # Metadata-only reshape (contiguous) -> no extra HBM pass over x.
    x2d = x.reshape(B, L)

    # Batch-row tile: as big as VMEM comfortably allows. TB=512 f32 working set:
    # 2*(TB*L + TB*S*E)*4 ~ 18 MiB double-buffered + ~1 MiB residents -> fits the
    # 48 MiB scoped limit below and v7x's 64 MiB physical VMEM. Tiny B => one
    # grid step (no per-step overhead); large B => >=2 "parallel" steps so v7x's
    # two TensorCores both get work.
    if block_rows is None:
        block_rows = min(B, 512)
        if block_rows != B:
            block_rows -= block_rows % 8
    TB = block_rows
    assert TB == B or TB % 8 == 0, "row tile must be 8-aligned (sublane tiling)"
    grid = (pl.cdiv(B, TB),)

    kernel = functools.partial(
        _tokenizer_kernel, num_channels=C, num_points=P,
        out_cols_per_channel=Tc * E)

    # Advisory cost hint (same FLOPs as gather-as-matmul + per-token linear).
    flops = 2 * B * C * P * Tc * E
    bytes_accessed = 4 * (B * L + P * Tc * E + Tc * E + B * seq_len * E)

    out2d = pl.pallas_call(
        kernel,
        out_shape=jax.ShapeDtypeStruct((B, seq_len * E), x.dtype),
        grid_spec=pltpu.PrefetchScalarGridSpec(
            num_scalar_prefetch=0,
            grid=grid,
            in_specs=[
                pl.BlockSpec((TB, L), lambda i: (i, 0)),        # x row tile (pipelined)
                pl.BlockSpec((P, Tc * E), lambda i: (0, 0)),    # folded weight (resident)
                pl.BlockSpec((1, Tc * E), lambda i: (0, 0)),    # tiled bias (resident)
            ],
            out_specs=pl.BlockSpec((TB, seq_len * E), lambda i: (i, 0)),
        ),
        compiler_params=pltpu.CompilerParams(
            dimension_semantics=("parallel",),   # v7x: both TCs take row tiles
            vmem_limit_bytes=48 << 20,           # v5e's 16 MiB scoped default is too small at TB>=256
        ),
        cost_estimate=pl.CostEstimate(
            flops=flops, transcendentals=0, bytes_accessed=bytes_accessed),
    )(x2d, w_comb, bias_tiled)

    # Metadata-only: (B, S*E) -> (B, S, E); row layout is already token-major.
    return out2d.reshape(B, seq_len, E)


@functools.partial(jax.jit, static_argnames=("num_points", "seq_len", "block_rows"))
def linear_tokenizer_forward(x, weight, bias, perm_key, *, num_points, seq_len,
                             block_rows=None):
    """Mirrors the PyTorch module's forward. torch.randperm's implicit RNG is
    replaced by a deterministic permutation derived from `perm_key`; the SAME
    indices are folded into the kernel's weight (no extra pass over x)."""
    assert x.shape[-1] == num_points
    perm = jax.random.permutation(perm_key, num_points)
    return pallas_linear_tokenizer(x, weight, bias, perm,
                                   seq_len=seq_len, block_rows=block_rows)


if __name__ == "__main__":
    # Small, TPU-friendly shapes consistent with the module:
    #   input_size = 6 * num_points / seq_len = 128,
    #   per-row output width = seq_len * embedding_dim = 3072 (lane-dense).
    batch = 32
    num_points = 256
    seq_len = 12
    embedding_dim = 256
    input_size = (6 * num_points) // seq_len   # = 128

    key = jax.random.PRNGKey(0)
    k_x, k_w, k_b, k_perm = jax.random.split(key, 4)

    x = jax.random.normal(k_x, (batch, 6, num_points), dtype=jnp.float32)

    # nn.Linear-style init: U(-1/sqrt(fan_in), +1/sqrt(fan_in)).
    bound = 1.0 / (input_size ** 0.5)
    weight = jax.random.uniform(k_w, (embedding_dim, input_size),
                                minval=-bound, maxval=bound, dtype=jnp.float32)
    bias = jax.random.uniform(k_b, (embedding_dim,),
                              minval=-bound, maxval=bound, dtype=jnp.float32)

    # Default block_rows = min(B, 512) -> full batch in one grid step here.
    out = linear_tokenizer_forward(
        x, weight, bias, k_perm,
        num_points=num_points, seq_len=seq_len)
    out = jax.block_until_ready(out)

    # Pure-JAX reference (same key => identical permutation indices).
    perm = jax.random.permutation(k_perm, num_points)
    tokens = x[:, :, perm].reshape(batch, -1).reshape(batch, seq_len, input_size)
    ref = jnp.einsum("bsk,ek->bse", tokens, weight,
                     precision=lax.Precision.HIGHEST) + bias

    assert out.shape == (batch, seq_len, embedding_dim)
    max_err = float(jnp.max(jnp.abs(out - ref)))
    assert jnp.allclose(out, ref, atol=2e-4, rtol=2e-4), max_err

    print("KERNEL_OK")
</pallas_src>

<mosaic_0001>
module attributes {stable_mosaic.version = 11 : i64} {
  func.func @_tokenizer_kernel(%arg0: i32, %arg1: memref<32x1536xf32, #tpu.memory_space<vmem>>, %arg2: memref<256x512xf32, #tpu.memory_space<vmem>>, %arg3: memref<1x512xf32, #tpu.memory_space<vmem>>, %arg4: memref<32x3072xf32, #tpu.memory_space<vmem>>) attributes {dimension_semantics = [#tpu.dimension_semantics<parallel>], iteration_bounds = array<i64: 1>, scalar_prefetch = 0 : i64, scratch_operands = 0 : i64, tpu.core_type = #tpu.core_type<tc>, window_params = [{transform_indices = @transform_0, window_bounds = array<i64: 32, 1536>}, {pipeline_mode = #tpu.pipeline_mode<synchronous>, transform_indices = @transform_1, window_bounds = array<i64: 256, 512>}, {pipeline_mode = #tpu.pipeline_mode<synchronous>, transform_indices = @transform_2, window_bounds = array<i64: 1, 512>}, {transform_indices = @transform_3, window_bounds = array<i64: 32, 3072>}]} {
    %c0 = arith.constant 0 : index
    %c0_0 = arith.constant 0 : index
    %0 = vector.load %arg1[%c0, %c0_0] : memref<32x1536xf32, #tpu.memory_space<vmem>>, vector<32x256xf32>
    %c0_1 = arith.constant 0 : index
    %c0_2 = arith.constant 0 : index
    %1 = vector.load %arg2[%c0_1, %c0_2] : memref<256x512xf32, #tpu.memory_space<vmem>>, vector<256x512xf32>
    %cst = arith.constant dense<0.000000e+00> : vector<32x512xf32>
    %2 = tpu.matmul %0, %1, %cst {dimension_numbers = #tpu.dot_dimension_numbers<[1], [0], [0], [1], [0, 0, 1, 1], [], []>} : vector<32x256xf32>, vector<256x512xf32>, vector<32x512xf32> -> vector<32x512xf32>
    %c0_3 = arith.constant 0 : index
    %c0_4 = arith.constant 0 : index
    %3 = vector.load %arg3[%c0_3, %c0_4] : memref<1x512xf32, #tpu.memory_space<vmem>>, vector<1x512xf32>
    %4 = vector.broadcast %3 : vector<1x512xf32> to vector<32x512xf32>
    %5 = arith.addf %2, %4 : vector<32x512xf32>
    %c0_5 = arith.constant 0 : index
    %c0_6 = arith.constant 0 : index
    %6 = vector.load %arg4[%c0_5, %c0_6] : memref<32x3072xf32, #tpu.memory_space<vmem>>, vector<32x512xf32>
    tpu.vector_store %arg4[%c0_5, %c0_6], %5 {strides = array<i32>} : memref<32x3072xf32, #tpu.memory_space<vmem>>, vector<32x512xf32>,
    %c0_7 = arith.constant 0 : index
    %c256 = arith.constant 256 : index
    %7 = vector.load %arg1[%c0_7, %c256] : memref<32x1536xf32, #tpu.memory_space<vmem>>, vector<32x256xf32>
    %c0_8 = arith.constant 0 : index
    %c0_9 = arith.constant 0 : index
    %8 = vector.load %arg2[%c0_8, %c0_9] : memref<256x512xf32, #tpu.memory_space<vmem>>, vector<256x512xf32>
    %cst_10 = arith.constant dense<0.000000e+00> : vector<32x512xf32>
    %9 = tpu.matmul %7, %8, %cst_10 {dimension_numbers = #tpu.dot_dimension_numbers<[1], [0], [0], [1], [0, 0, 1, 1], [], []>} : vector<32x256xf32>, vector<256x512xf32>, vector<32x512xf32> -> vector<32x512xf32>
    %c0_11 = arith.constant 0 : index
    %c0_12 = arith.constant 0 : index
    %10 = vector.load %arg3[%c0_11, %c0_12] : memref<1x512xf32, #tpu.memory_space<vmem>>, vector<1x512xf32>
    %11 = vector.broadcast %10 : vector<1x512xf32> to vector<32x512xf32>
    %12 = arith.addf %9, %11 : vector<32x512xf32>
    %c0_13 = arith.constant 0 : index
    %c512 = arith.constant 512 : index
    %13 = vector.load %arg4[%c0_13, %c512] : memref<32x3072xf32, #tpu.memory_space<vmem>>, vector<32x512xf32>
    tpu.vector_store %arg4[%c0_13, %c512], %12 {strides = array<i32>} : memref<32x3072xf32, #tpu.memory_space<vmem>>, vector<32x512xf32>,
    %c0_14 = arith.constant 0 : index
    %c512_15 = arith.constant 512 : index
    %14 = vector.load %arg1[%c0_14, %c512_15] : memref<32x1536xf32, #tpu.memory_space<vmem>>, vector<32x256xf32>
    %c0_16 = arith.constant 0 : index
    %c0_17 = arith.constant 0 : index
    %15 = vector.load %arg2[%c0_16, %c0_17] : memref<256x512xf32, #tpu.memory_space<vmem>>, vector<256x512xf32>
    %cst_18 = arith.constant dense<0.000000e+00> : vector<32x512xf32>
    %16 = tpu.matmul %14, %15, %cst_18 {dimension_numbers = #tpu.dot_dimension_numbers<[1], [0], [0], [1], [0, 0, 1, 1], [], []>} : vector<32x256xf32>, vector<256x512xf32>, vector<32x512xf32> -> vector<32x512xf32>
    %c0_19 = arith.constant 0 : index
    %c0_20 = arith.constant 0 : index
    %17 = vector.load %arg3[%c0_19, %c0_20] : memref<1x512xf32, #tpu.memory_space<vmem>>, vector<1x512xf32>
    %18 = vector.broadcast %17 : vector<1x512xf32> to vector<32x512xf32>
    %19 = arith.addf %16, %18 : vector<32x512xf32>
    %c0_21 = arith.constant 0 : index
    %c1024 = arith.constant 1024 : index
    %20 = vector.load %arg4[%c0_21, %c1024] : memref<32x3072xf32, #tpu.memory_space<vmem>>, vector<32x512xf32>
    tpu.vector_store %arg4[%c0_21, %c1024], %19 {strides = array<i32>} : memref<32x3072xf32, #tpu.memory_space<vmem>>, vector<32x512xf32>,
    %c0_22 = arith.constant 0 : index
    %c768 = arith.constant 768 : index
    %21 = vector.load %arg1[%c0_22, %c768] : memref<32x1536xf32, #tpu.memory_space<vmem>>, vector<32x256xf32>
    %c0_23 = arith.constant 0 : index
    %c0_24 = arith.constant 0 : index
    %22 = vector.load %arg2[%c0_23, %c0_24] : memref<256x512xf32, #tpu.memory_space<vmem>>, vector<256x512xf32>
    %cst_25 = arith.constant dense<0.000000e+00> : vector<32x512xf32>
    %23 = tpu.matmul %21, %22, %cst_25 {dimension_numbers = #tpu.dot_dimension_numbers<[1], [0], [0], [1], [0, 0, 1, 1], [], []>} : vector<32x256xf32>, vector<256x512xf32>, vector<32x512xf32> -> vector<32x512xf32>
    %c0_26 = arith.constant 0 : index
    %c0_27 = arith.constant 0 : index
    %24 = vector.load %arg3[%c0_26, %c0_27] : memref<1x512xf32, #tpu.memory_space<vmem>>, vector<1x512xf32>
    %25 = vector.broadcast %24 : vector<1x512xf32> to vector<32x512xf32>
    %26 = arith.addf %23, %25 : vector<32x512xf32>
    %c0_28 = arith.constant 0 : index
    %c1536 = arith.constant 1536 : index
    %27 = vector.load %arg4[%c0_28, %c1536] : memref<32x3072xf32, #tpu.memory_space<vmem>>, vector<32x512xf32>
    tpu.vector_store %arg4[%c0_28, %c1536], %26 {strides = array<i32>} : memref<32x3072xf32, #tpu.memory_space<vmem>>, vector<32x512xf32>,
    %c0_29 = arith.constant 0 : index
    %c1024_30 = arith.constant 1024 : index
    %28 = vector.load %arg1[%c0_29, %c1024_30] : memref<32x1536xf32, #tpu.memory_space<vmem>>, vector<32x256xf32>
    %c0_31 = arith.constant 0 : index
    %c0_32 = arith.constant 0 : index
    %29 = vector.load %arg2[%c0_31, %c0_32] : memref<256x512xf32, #tpu.memory_space<vmem>>, vector<256x512xf32>
    %cst_33 = arith.constant dense<0.000000e+00> : vector<32x512xf32>
    %30 = tpu.matmul %28, %29, %cst_33 {dimension_numbers = #tpu.dot_dimension_numbers<[1], [0], [0], [1], [0, 0, 1, 1], [], []>} : vector<32x256xf32>, vector<256x512xf32>, vector<32x512xf32> -> vector<32x512xf32>
    %c0_34 = arith.constant 0 : index
    %c0_35 = arith.constant 0 : index
    %31 = vector.load %arg3[%c0_34, %c0_35] : memref<1x512xf32, #tpu.memory_space<vmem>>, vector<1x512xf32>
    %32 = vector.broadcast %31 : vector<1x512xf32> to vector<32x512xf32>
    %33 = arith.addf %30, %32 : vector<32x512xf32>
    %c0_36 = arith.constant 0 : index
    %c2048 = arith.constant 2048 : index
    %34 = vector.load %arg4[%c0_36, %c2048] : memref<32x3072xf32, #tpu.memory_space<vmem>>, vector<32x512xf32>
    tpu.vector_store %arg4[%c0_36, %c2048], %33 {strides = array<i32>} : memref<32x3072xf32, #tpu.memory_space<vmem>>, vector<32x512xf32>,
    %c0_37 = arith.constant 0 : index
    %c1280 = arith.constant 1280 : index
    %35 = vector.load %arg1[%c0_37, %c1280] : memref<32x1536xf32, #tpu.memory_space<vmem>>, vector<32x256xf32>
    %c0_38 = arith.constant 0 : index
    %c0_39 = arith.constant 0 : index
    %36 = vector.load %arg2[%c0_38, %c0_39] : memref<256x512xf32, #tpu.memory_space<vmem>>, vector<256x512xf32>
    %cst_40 = arith.constant dense<0.000000e+00> : vector<32x512xf32>
    %37 = tpu.matmul %35, %36, %cst_40 {dimension_numbers = #tpu.dot_dimension_numbers<[1], [0], [0], [1], [0, 0, 1, 1], [], []>} : vector<32x256xf32>, vector<256x512xf32>, vector<32x512xf32> -> vector<32x512xf32>
    %c0_41 = arith.constant 0 : index
    %c0_42 = arith.constant 0 : index
    %38 = vector.load %arg3[%c0_41, %c0_42] : memref<1x512xf32, #tpu.memory_space<vmem>>, vector<1x512xf32>
    %39 = vector.broadcast %38 : vector<1x512xf32> to vector<32x512xf32>
    %40 = arith.addf %37, %39 : vector<32x512xf32>
    %c0_43 = arith.constant 0 : index
    %c2560 = arith.constant 2560 : index
    %41 = vector.load %arg4[%c0_43, %c2560] : memref<32x3072xf32, #tpu.memory_space<vmem>>, vector<32x512xf32>
    tpu.vector_store %arg4[%c0_43, %c2560], %40 {strides = array<i32>} : memref<32x3072xf32, #tpu.memory_space<vmem>>, vector<32x512xf32>,
    return
  }
  func.func @transform_0(%arg0: i32) -> (i32, i32) {
    %c0_i32 = arith.constant 0 : i32
    %c0_i32_0 = arith.constant 0 : i32
    return %arg0, %c0_i32 : i32, i32
  }
  func.func @transform_1(%arg0: i32) -> (i32, i32) {
    %c0_i32 = arith.constant 0 : i32
    %c0_i32_0 = arith.constant 0 : i32
    %c0_i32_1 = arith.constant 0 : i32
    return %c0_i32, %c0_i32_0 : i32, i32
  }
  func.func @transform_2(%arg0: i32) -> (i32, i32) {
    %c0_i32 = arith.constant 0 : i32
    %c0_i32_0 = arith.constant 0 : i32
    %c0_i32_1 = arith.constant 0 : i32
    return %c0_i32, %c0_i32_0 : i32, i32
  }
  func.func @transform_3(%arg0: i32) -> (i32, i32) {
    %c0_i32 = arith.constant 0 : i32
    %c0_i32_0 = arith.constant 0 : i32
    return %arg0, %c0_i32 : i32, i32
  }
}

</mosaic_0001>

<llo_original>
// kernel: linear_tokenizer_forward.1
$region0: #{linear_tokenizer_forward.1}
  #allocation0 [shape = 'u32[]', space=smem, size = 0x4, offset = 0x4, fixed_abs, tag = 'smem constant byte address 0x4 - core index']
  #allocation1 [shape = 'u32[72,128]{1,0:T(1,128)}', space=vmem, size = 0x9000, scoped, tag = 'internal scratch']
  %s0 = inlined_call_operand.vmem [shape: f32[32,1536], index: 0, kind: input, shape index: {}]
  %s1 = inlined_call_operand.vmem [shape: f32[256,512], index: 1, kind: input, shape index: {}]
  %s2 = inlined_call_operand.vmem [shape: f32[1,512], index: 2, kind: input, shape index: {}]
  %s3 = inlined_call_operand.vmem [shape: f32[32,3072], index: 3, kind: output, shape index: {}]
  %s4 = sld [smem:[#allocation0]]
  $region22: #{linear_tokenizer_forward.1} parent=0
    _
  %s6 = ssub.s32 1, %s4
  %s7 = scalar_select 0, %s6, %s4
  // Predicated region
  $region2: #{linear_tokenizer_forward.1} parent=0 // pred_check
    _
  $region3: #{linear_tokenizer_forward.1} parent=0 // pred_check_branch
    %9 = sbr.rel (0) target = $region5
  $region4: #{linear_tokenizer_forward.1} parent=0 // pred_region
    _
  $region5: #{linear_tokenizer_forward.1} parent=0 // pred_fallthru
    _
  // Predicated region
  $region6: #{linear_tokenizer_forward.1} parent=0 // pred_check
    _
  $region7: #{linear_tokenizer_forward.1} parent=0 // pred_check_branch
    %11 = sbr.rel (0) target = $region9
  $region8: #{linear_tokenizer_forward.1} parent=0 // pred_region
    _
  $region9: #{linear_tokenizer_forward.1} parent=0 // pred_fallthru
    _
  // Predicated region
  $region10: #{linear_tokenizer_forward.1} parent=0 // pred_check
    _
  $region11: #{linear_tokenizer_forward.1} parent=0 // pred_check_branch
    %13 = sbr.rel (0) target = $region13
  $region12: #{linear_tokenizer_forward.1} parent=0 // pred_region
    _
  $region13: #{linear_tokenizer_forward.1} parent=0 // pred_fallthru
    _
  %v14 = vld [vmem:[%s0] sm:$0xff]
  %v15 = vld [vmem:[%s0 + $0x8] sm:$0xff]
  %v16 = vld [vmem:[%s0 + $0x60] sm:$0xff]
  %v17 = vld [vmem:[%s0 + $0x68] sm:$0xff]
  %v18 = vld [vmem:[%s0 + $0xc0] sm:$0xff]
  %v19 = vld [vmem:[%s0 + $0xc8] sm:$0xff]
  %v20 = vld [vmem:[%s0 + $0x120] sm:$0xff]
  %v21 = vld [vmem:[%s0 + $0x128] sm:$0xff]
  %v22 = vld [vmem:[%s1] sm:$0xff]
  %v23 = vld [vmem:[%s1 + $0x8] sm:$0xff]
  %v24 = vld [vmem:[%s1 + $0x10] sm:$0xff]
  %v25 = vld [vmem:[%s1 + $0x18] sm:$0xff]
  %v26 = vld [vmem:[%s1 + $0x20] sm:$0xff]
  %v27 = vld [vmem:[%s1 + $0x28] sm:$0xff]
  %v28 = vld [vmem:[%s1 + $0x30] sm:$0xff]
  %v29 = vld [vmem:[%s1 + $0x38] sm:$0xff]
  %v30 = vld [vmem:[%s1 + $0x40] sm:$0xff]
  %v31 = vld [vmem:[%s1 + $0x48] sm:$0xff]
  %v32 = vld [vmem:[%s1 + $0x50] sm:$0xff]
  %v33 = vld [vmem:[%s1 + $0x58] sm:$0xff]
  %v34 = vld [vmem:[%s1 + $0x60] sm:$0xff]
  %v35 = vld [vmem:[%s1 + $0x68] sm:$0xff]
  %v36 = vld [vmem:[%s1 + $0x70] sm:$0xff]
  %v37 = vld [vmem:[%s1 + $0x78] sm:$0xff]
  %v38 = vld [vmem:[%s1 + $0x80] sm:$0xff]
  %v39 = vld [vmem:[%s1 + $0x88] sm:$0xff]
  %v40 = vld [vmem:[%s1 + $0x90] sm:$0xff]
  %v41 = vld [vmem:[%s1 + $0x98] sm:$0xff]
  %v42 = vld [vmem:[%s1 + $0xa0] sm:$0xff]
  %v43 = vld [vmem:[%s1 + $0xa8] sm:$0xff]
  %v44 = vld [vmem:[%s1 + $0xb0] sm:$0xff]
  %v45 = vld [vmem:[%s1 + $0xb8] sm:$0xff]
  %v46 = vld [vmem:[%s1 + $0xc0] sm:$0xff]
  %v47 = vld [vmem:[%s1 + $0xc8] sm:$0xff]
  %v48 = vld [vmem:[%s1 + $0xd0] sm:$0xff]
  %v49 = vld [vmem:[%s1 + $0xd8] sm:$0xff]
  %v50 = vld [vmem:[%s1 + $0xe0] sm:$0xff]
  %v51 = vld [vmem:[%s1 + $0xe8] sm:$0xff]
  %v52 = vld [vmem:[%s1 + $0xf0] sm:$0xff]
  %v53 = vld [vmem:[%s1 + $0xf8] sm:$0xff]
  %v54 = vld [vmem:[%s1 + $0x100] sm:$0xff]
  %v55 = vld [vmem:[%s1 + $0x108] sm:$0xff]
  %v56 = vld [vmem:[%s1 + $0x110] sm:$0xff]
  %v57 = vld [vmem:[%s1 + $0x118] sm:$0xff]
  %v58 = vld [vmem:[%s1 + $0x120] sm:$0xff]
  %v59 = vld [vmem:[%s1 + $0x128] sm:$0xff]
  %v60 = vld [vmem:[%s1 + $0x130] sm:$0xff]
  %v61 = vld [vmem:[%s1 + $0x138] sm:$0xff]
  %v62 = vld [vmem:[%s1 + $0x140] sm:$0xff]
  %v63 = vld [vmem:[%s1 + $0x148] sm:$0xff]
  %v64 = vld [vmem:[%s1 + $0x150] sm:$0xff]
  %v65 = vld [vmem:[%s1 + $0x158] sm:$0xff]
  %v66 = vld [vmem:[%s1 + $0x160] sm:$0xff]
  %v67 = vld [vmem:[%s1 + $0x168] sm:$0xff]
  %v68 = vld [vmem:[%s1 + $0x170] sm:$0xff]
  %v69 = vld [vmem:[%s1 + $0x178] sm:$0xff]
  %v70 = vld [vmem:[%s1 + $0x180] sm:$0xff]
  %v71 = vld [vmem:[%s1 + $0x188] sm:$0xff]
  %v72 = vld [vmem:[%s1 + $0x190] sm:$0xff]
  %v73 = vld [vmem:[%s1 + $0x198] sm:$0xff]
  %v74 = vld [vmem:[%s1 + $0x1a0] sm:$0xff]
  %v75 = vld [vmem:[%s1 + $0x1a8] sm:$0xff]
  %v76 = vld [vmem:[%s1 + $0x1b0] sm:$0xff]
  %v77 = vld [vmem:[%s1 + $0x1b8] sm:$0xff]
  %v78 = vld [vmem:[%s1 + $0x1c0] sm:$0xff]
  %v79 = vld [vmem:[%s1 + $0x1c8] sm:$0xff]
  %v80 = vld [vmem:[%s1 + $0x1d0] sm:$0xff]
  %v81 = vld [vmem:[%s1 + $0x1d8] sm:$0xff]
  %v82 = vld [vmem:[%s1 + $0x1e0] sm:$0xff]
  %v83 = vld [vmem:[%s1 + $0x1e8] sm:$0xff]
  %v84 = vld [vmem:[%s1 + $0x1f0] sm:$0xff]
  %v85 = vld [vmem:[%s1 + $0x1f8] sm:$0xff]
  %v86 = vld [vmem:[%s1 + $0x200] sm:$0xff]
  %v87 = vld [vmem:[%s1 + $0x208] sm:$0xff]
  %v88 = vld [vmem:[%s1 + $0x210] sm:$0xff]
  %v89 = vld [vmem:[%s1 + $0x218] sm:$0xff]
  %v90 = vld [vmem:[%s1 + $0x220] sm:$0xff]
  %v91 = vld [vmem:[%s1 + $0x228] sm:$0xff]
  %v92 = vld [vmem:[%s1 + $0x230] sm:$0xff]
  %v93 = vld [vmem:[%s1 + $0x238] sm:$0xff]
  %v94 = vld [vmem:[%s1 + $0x240] sm:$0xff]
  %v95 = vld [vmem:[%s1 + $0x248] sm:$0xff]
  %v96 = vld [vmem:[%s1 + $0x250] sm:$0xff]
  %v97 = vld [vmem:[%s1 + $0x258] sm:$0xff]
  %v98 = vld [vmem:[%s1 + $0x260] sm:$0xff]
  %v99 = vld [vmem:[%s1 + $0x268] sm:$0xff]
  %v100 = vld [vmem:[%s1 + $0x270] sm:$0xff]
  %v101 = vld [vmem:[%s1 + $0x278] sm:$0xff]
  %v102 = vld [vmem:[%s1 + $0x280] sm:$0xff]
  %v103 = vld [vmem:[%s1 + $0x288] sm:$0xff]
  %v104 = vld [vmem:[%s1 + $0x290] sm:$0xff]
  %v105 = vld [vmem:[%s1 + $0x298] sm:$0xff]
  %v106 = vld [vmem:[%s1 + $0x2a0] sm:$0xff]
  %v107 = vld [vmem:[%s1 + $0x2a8] sm:$0xff]
  %v108 = vld [vmem:[%s1 + $0x2b0] sm:$0xff]
  %v109 = vld [vmem:[%s1 + $0x2b8] sm:$0xff]
  %v110 = vld [vmem:[%s1 + $0x2c0] sm:$0xff]
  %v111 = vld [vmem:[%s1 + $0x2c8] sm:$0xff]
  %v112 = vld [vmem:[%s1 + $0x2d0] sm:$0xff]
  %v113 = vld [vmem:[%s1 + $0x2d8] sm:$0xff]
  %v114 = vld [vmem:[%s1 + $0x2e0] sm:$0xff]
  %v115 = vld [vmem:[%s1 + $0x2e8] sm:$0xff]
  %v116 = vld [vmem:[%s1 + $0x2f0] sm:$0xff]
  %v117 = vld [vmem:[%s1 + $0x2f8] sm:$0xff]
  %v118 = vld [vmem:[%s1 + $0x300] sm:$0xff]
  %v119 = vld [vmem:[%s1 + $0x308] sm:$0xff]
  %v120 = vld [vmem:[%s1 + $0x310] sm:$0xff]
  %v121 = vld [vmem:[%s1 + $0x318] sm:$0xff]
  %v122 = vld [vmem:[%s1 + $0x320] sm:$0xff]
  %v123 = vld [vmem:[%s1 + $0x328] sm:$0xff]
  %v124 = vld [vmem:[%s1 + $0x330] sm:$0xff]
  %v125 = vld [vmem:[%s1 + $0x338] sm:$0xff]
  %v126 = vld [vmem:[%s1 + $0x340] sm:$0xff]
  %v127 = vld [vmem:[%s1 + $0x348] sm:$0xff]
  %v128 = vld [vmem:[%s1 + $0x350] sm:$0xff]
  %v129 = vld [vmem:[%s1 + $0x358] sm:$0xff]
  %v130 = vld [vmem:[%s1 + $0x360] sm:$0xff]
  %v131 = vld [vmem:[%s1 + $0x368] sm:$0xff]
  %v132 = vld [vmem:[%s1 + $0x370] sm:$0xff]
  %v133 = vld [vmem:[%s1 + $0x378] sm:$0xff]
  %v134 = vld [vmem:[%s1 + $0x380] sm:$0xff]
  %v135 = vld [vmem:[%s1 + $0x388] sm:$0xff]
  %v136 = vld [vmem:[%s1 + $0x390] sm:$0xff]
  %v137 = vld [vmem:[%s1 + $0x398] sm:$0xff]
  %v138 = vld [vmem:[%s1 + $0x3a0] sm:$0xff]
  %v139 = vld [vmem:[%s1 + $0x3a8] sm:$0xff]
  %v140 = vld [vmem:[%s1 + $0x3b0] sm:$0xff]
  %v141 = vld [vmem:[%s1 + $0x3b8] sm:$0xff]
  %v142 = vld [vmem:[%s1 + $0x3c0] sm:$0xff]
  %v143 = vld [vmem:[%s1 + $0x3c8] sm:$0xff]
  %v144 = vld [vmem:[%s1 + $0x3d0] sm:$0xff]
  %v145 = vld [vmem:[%s1 + $0x3d8] sm:$0xff]
  %v146 = vld [vmem:[%s1 + $0x3e0] sm:$0xff]
  %v147 = vld [vmem:[%s1 + $0x3e8] sm:$0xff]
  %v148 = vld [vmem:[%s1 + $0x3f0] sm:$0xff]
  %v149 = vld [vmem:[%s1 + $0x3f8] sm:$0xff]
  %v150 = vld [vmem:[%s2] sm:$0xf]
  %v152 = vperm.slane %v150, 0
  %v153 = vperm.slane %v150, 1
  %v154 = vperm.slane %v150, 2
  %v155 = vperm.slane %v150, 3
  %160 = vmatpush.msra.mxu0 %v82
  %161 = vmatpush.msra.mxu0 %v78
  %162 = vmatpush.msra.mxu0 %v74
  %163 = vmatpush.msra.mxu0 %v70
  %164 = vmatpush.msra.mxu0 %v66
  %165 = vmatpush.msra.mxu0 %v62
  %166 = vmatpush.msra.mxu0 %v58
  %167 = vmatpush.msra.mxu0 %v54
  %168 = vmatpush.msra.mxu0 %v50
  %169 = vmatpush.msra.mxu0 %v46
  %170 = vmatpush.msra.mxu0 %v42
  %171 = vmatpush.msra.mxu0 %v38
  %172 = vmatpush.msra.mxu0 %v34
  %173 = vmatpush.msra.mxu0 %v30
  %174 = vmatpush.msra.mxu0 %v26
  %175 = vmatpush.msra.mxu0 %v22
  %176 = vmatmul.f32.gmra.mxu0 %v14
  %v177 = vpop.f32.mrf.mxu0
  %v178 = vadd.f32 %v152, %v177
  %179 = vmatmul.f32.gmra.mxu0 %v16
  %v180 = vpop.f32.mrf.mxu0
  %v181 = vadd.f32 %v152, %v180
  %182 = vmatmul.f32.gmra.mxu0 %v18
  %v183 = vpop.f32.mrf.mxu0
  %v184 = vadd.f32 %v152, %v183
  %185 = vmatmul.f32.gmra.mxu0 %v20
  %v186 = vpop.f32.mrf.mxu0
  %v187 = vadd.f32 %v152, %v186
  %188 = vdwg.mxu0
  %189 = vmatpush.msra.mxu0 %v146
  %190 = vmatpush.msra.mxu0 %v142
  %191 = vmatpush.msra.mxu0 %v138
  %192 = vmatpush.msra.mxu0 %v134
  %193 = vmatpush.msra.mxu0 %v130
  %194 = vmatpush.msra.mxu0 %v126
  %195 = vmatpush.msra.mxu0 %v122
  %196 = vmatpush.msra.mxu0 %v118
  %197 = vmatpush.msra.mxu0 %v114
  %198 = vmatpush.msra.mxu0 %v110
  %199 = vmatpush.msra.mxu0 %v106
  %200 = vmatpush.msra.mxu0 %v102
  %201 = vmatpush.msra.mxu0 %v98
  %202 = vmatpush.msra.mxu0 %v94
  %203 = vmatpush.msra.mxu0 %v90
  %204 = vmatpush.msra.mxu0 %v86
  %205 = vmatmul.f32.gmra.mxu0 %v15
  %v206 = vpop.f32.mrf.mxu0
  %v207 = vadd.f32 %v178, %v206
  %208 = vmatmul.f32.gmra.mxu0 %v17
  %v209 = vpop.f32.mrf.mxu0
  %v210 = vadd.f32 %v181, %v209
  %211 = vmatmul.f32.gmra.mxu0 %v19
  %v212 = vpop.f32.mrf.mxu0
  %v213 = vadd.f32 %v184, %v212
  %214 = vmatmul.f32.gmra.mxu0 %v21
  %v215 = vpop.f32.mrf.mxu0
  %v216 = vadd.f32 %v187, %v215
  %217 = vdwg.mxu0
  %218 = vmatpush.msra.mxu0 %v83
  %219 = vmatpush.msra.mxu0 %v79
  %220 = vmatpush.msra.mxu0 %v75
  %221 = vmatpush.msra.mxu0 %v71
  %222 = vmatpush.msra.mxu0 %v67
  %223 = vmatpush.msra.mxu0 %v63
  %224 = vmatpush.msra.mxu0 %v59
  %225 = vmatpush.msra.mxu0 %v55
  %226 = vmatpush.msra.mxu0 %v51
  %227 = vmatpush.msra.mxu0 %v47
  %228 = vmatpush.msra.mxu0 %v43
  %229 = vmatpush.msra.mxu0 %v39
  %230 = vmatpush.msra.mxu0 %v35
  %231 = vmatpush.msra.mxu0 %v31
  %232 = vmatpush.msra.mxu0 %v27
  %233 = vmatpush.msra.mxu0 %v23
  %234 = vmatmul.f32.gmra.mxu0 %v14
  %v235 = vpop.f32.mrf.mxu0
  %v236 = vadd.f32 %v153, %v235
  %237 = vmatmul.f32.gmra.mxu0 %v16
  %v238 = vpop.f32.mrf.mxu0
  %v239 = vadd.f32 %v153, %v238
  %240 = vmatmul.f32.gmra.mxu0 %v18
  %v241 = vpop.f32.mrf.mxu0
  %v242 = vadd.f32 %v153, %v241
  %243 = vmatmul.f32.gmra.mxu0 %v20
  %v244 = vpop.f32.mrf.mxu0
  %v245 = vadd.f32 %v153, %v244
  %246 = vdwg.mxu0
  %247 = vmatpush.msra.mxu0 %v147
  %248 = vmatpush.msra.mxu0 %v143
  %249 = vmatpush.msra.mxu0 %v139
  %250 = vmatpush.msra.mxu0 %v135
  %251 = vmatpush.msra.mxu0 %v131
  %252 = vmatpush.msra.mxu0 %v127
  %253 = vmatpush.msra.mxu0 %v123
  %254 = vmatpush.msra.mxu0 %v119
  %255 = vmatpush.msra.mxu0 %v115
  %256 = vmatpush.msra.mxu0 %v111
  %257 = vmatpush.msra.mxu0 %v107
  %258 = vmatpush.msra.mxu0 %v103
  %259 = vmatpush.msra.mxu0 %v99
  %260 = vmatpush.msra.mxu0 %v95
  %261 = vmatpush.msra.mxu0 %v91
  %262 = vmatpush.msra.mxu0 %v87
  %263 = vmatmul.f32.gmra.mxu0 %v15
  %v264 = vpop.f32.mrf.mxu0
  %v265 = vadd.f32 %v236, %v264
  %266 = vmatmul.f32.gmra.mxu0 %v17
  %v267 = vpop.f32.mrf.mxu0
  %v268 = vadd.f32 %v239, %v267
  %269 = vmatmul.f32.gmra.mxu0 %v19
  %v270 = vpop.f32.mrf.mxu0
  %v271 = vadd.f32 %v242, %v270
  %272 = vmatmul.f32.gmra.mxu0 %v21
  %v273 = vpop.f32.mrf.mxu0
  %v274 = vadd.f32 %v245, %v273
  %275 = vdwg.mxu0
  %276 = vmatpush.msra.mxu0 %v84
  %277 = vmatpush.msra.mxu0 %v80
  %278 = vmatpush.msra.mxu0 %v76
  %279 = vmatpush.msra.mxu0 %v72
  %280 = vmatpush.msra.mxu0 %v68
  %281 = vmatpush.msra.mxu0 %v64
  %282 = vmatpush.msra.mxu0 %v60
  %283 = vmatpush.msra.mxu0 %v56
  %284 = vmatpush.msra.mxu0 %v52
  %285 = vmatpush.msra.mxu0 %v48
  %286 = vmatpush.msra.mxu0 %v44
  %287 = vmatpush.msra.mxu0 %v40
  %288 = vmatpush.msra.mxu0 %v36
  %289 = vmatpush.msra.mxu0 %v32
  %290 = vmatpush.msra.mxu0 %v28
  %291 = vmatpush.msra.mxu0 %v24
  %292 = vmatmul.f32.gmra.mxu0 %v14
  %v293 = vpop.f32.mrf.mxu0
  %v294 = vadd.f32 %v154, %v293
  %295 = vmatmul.f32.gmra.mxu0 %v16
  %v296 = vpop.f32.mrf.mxu0
  %v297 = vadd.f32 %v154, %v296
  %298 = vmatmul.f32.gmra.mxu0 %v18
  %v299 = vpop.f32.mrf.mxu0
  %v300 = vadd.f32 %v154, %v299
  %301 = vmatmul.f32.gmra.mxu0 %v20
  %v302 = vpop.f32.mrf.mxu0
  %v303 = vadd.f32 %v154, %v302
  %304 = vdwg.mxu0
  %305 = vmatpush.msra.mxu0 %v148
  %306 = vmatpush.msra.mxu0 %v144
  %307 = vmatpush.msra.mxu0 %v140
  %308 = vmatpush.msra.mxu0 %v136
  %309 = vmatpush.msra.mxu0 %v132
  %310 = vmatpush.msra.mxu0 %v128
  %311 = vmatpush.msra.mxu0 %v124
  %312 = vmatpush.msra.mxu0 %v120
  %313 = vmatpush.msra.mxu0 %v116
  %314 = vmatpush.msra.mxu0 %v112
  %315 = vmatpush.msra.mxu0 %v108
  %316 = vmatpush.msra.mxu0 %v104
  %317 = vmatpush.msra.mxu0 %v100
  %318 = vmatpush.msra.mxu0 %v96
  %319 = vmatpush.msra.mxu0 %v92
  %320 = vmatpush.msra.mxu0 %v88
  %321 = vmatmul.f32.gmra.mxu0 %v15
  %v322 = vpop.f32.mrf.mxu0
  %v323 = vadd.f32 %v294, %v322
  %324 = vmatmul.f32.gmra.mxu0 %v17
  %v325 = vpop.f32.mrf.mxu0
  %v326 = vadd.f32 %v297, %v325
  %327 = vmatmul.f32.gmra.mxu0 %v19
  %v328 = vpop.f32.mrf.mxu0
  %v329 = vadd.f32 %v300, %v328
  %330 = vmatmul.f32.gmra.mxu0 %v21
  %v331 = vpop.f32.mrf.mxu0
  %v332 = vadd.f32 %v303, %v331
  %333 = vdwg.mxu0
  %334 = vmatpush.msra.mxu0 %v85
  %335 = vmatpush.msra.mxu0 %v81
  %336 = vmatpush.msra.mxu0 %v77
  %337 = vmatpush.msra.mxu0 %v73
  %338 = vmatpush.msra.mxu0 %v69
  %339 = vmatpush.msra.mxu0 %v65
  %340 = vmatpush.msra.mxu0 %v61
  %341 = vmatpush.msra.mxu0 %v57
  %342 = vmatpush.msra.mxu0 %v53
  %343 = vmatpush.msra.mxu0 %v49
  %344 = vmatpush.msra.mxu0 %v45
  %345 = vmatpush.msra.mxu0 %v41
  %346 = vmatpush.msra.mxu0 %v37
  %347 = vmatpush.msra.mxu0 %v33
  %348 = vmatpush.msra.mxu0 %v29
  %349 = vmatpush.msra.mxu0 %v25
  %350 = vmatmul.f32.gmra.mxu0 %v14
  %v351 = vpop.f32.mrf.mxu0
  %v352 = vadd.f32 %v155, %v351
  %353 = vmatmul.f32.gmra.mxu0 %v16
  %v354 = vpop.f32.mrf.mxu0
  %v355 = vadd.f32 %v155, %v354
  %356 = vmatmul.f32.gmra.mxu0 %v18
  %v357 = vpop.f32.mrf.mxu0
  %v358 = vadd.f32 %v155, %v357
  %359 = vmatmul.f32.gmra.mxu0 %v20
  %v360 = vpop.f32.mrf.mxu0
  %v361 = vadd.f32 %v155, %v360
  %362 = vdwg.mxu0
  %363 = vmatpush.msra.mxu0 %v149
  %364 = vmatpush.msra.mxu0 %v145
  %365 = vmatpush.msra.mxu0 %v141
  %366 = vmatpush.msra.mxu0 %v137
  %367 = vmatpush.msra.mxu0 %v133
  %368 = vmatpush.msra.mxu0 %v129
  %369 = vmatpush.msra.mxu0 %v125
  %370 = vmatpush.msra.mxu0 %v121
  %371 = vmatpush.msra.mxu0 %v117
  %372 = vmatpush.msra.mxu0 %v113
  %373 = vmatpush.msra.mxu0 %v109
  %374 = vmatpush.msra.mxu0 %v105
  %375 = vmatpush.msra.mxu0 %v101
  %376 = vmatpush.msra.mxu0 %v97
  %377 = vmatpush.msra.mxu0 %v93
  %378 = vmatpush.msra.mxu0 %v89
  %379 = vmatmul.f32.gmra.mxu0 %v15
  %v380 = vpop.f32.mrf.mxu0
  %v381 = vadd.f32 %v352, %v380
  %382 = vmatmul.f32.gmra.mxu0 %v17
  %v383 = vpop.f32.mrf.mxu0
  %v384 = vadd.f32 %v355, %v383
  %385 = vmatmul.f32.gmra.mxu0 %v19
  %v386 = vpop.f32.mrf.mxu0
  %v387 = vadd.f32 %v358, %v386
  %388 = vmatmul.f32.gmra.mxu0 %v21
  %v389 = vpop.f32.mrf.mxu0
  %v390 = vadd.f32 %v361, %v389
  %391 = vdwg.mxu0
  %392 = vst [vmem:[%s3] sm:$0xff] %v207
  %393 = vst [vmem:[%s3 + $0x8] sm:$0xff] %v265
  %394 = vst [vmem:[%s3 + $0x10] sm:$0xff] %v323
  %395 = vst [vmem:[%s3 + $0x18] sm:$0xff] %v381
  %396 = vst [vmem:[%s3 + $0xc0] sm:$0xff] %v210
  %397 = vst [vmem:[%s3 + $0xc8] sm:$0xff] %v268
  %398 = vst [vmem:[%s3 + $0xd0] sm:$0xff] %v326
  %399 = vst [vmem:[%s3 + $0xd8] sm:$0xff] %v384
  %400 = vst [vmem:[%s3 + $0x180] sm:$0xff] %v213
  %401 = vst [vmem:[%s3 + $0x188] sm:$0xff] %v271
  %402 = vst [vmem:[%s3 + $0x190] sm:$0xff] %v329
  %403 = vst [vmem:[%s3 + $0x198] sm:$0xff] %v387
  %404 = vst [vmem:[%s3 + $0x240] sm:$0xff] %v216
  %405 = vst [vmem:[%s3 + $0x248] sm:$0xff] %v274
  %406 = vst [vmem:[%s3 + $0x250] sm:$0xff] %v332
  %407 = vst [vmem:[%s3 + $0x258] sm:$0xff] %v390
  %v408 = vld [vmem:[%s0 + $0x10] sm:$0xff]
  %v409 = vld [vmem:[%s0 + $0x18] sm:$0xff]
  %v410 = vld [vmem:[%s0 + $0x70] sm:$0xff]
  %v411 = vld [vmem:[%s0 + $0x78] sm:$0xff]
  %v412 = vld [vmem:[%s0 + $0xd0] sm:$0xff]
  %v413 = vld [vmem:[%s0 + $0xd8] sm:$0xff]
  %v414 = vld [vmem:[%s0 + $0x130] sm:$0xff]
  %v415 = vld [vmem:[%s0 + $0x138] sm:$0xff]
  %v416 = vld [vmem:[%s1] sm:$0xff]
  %v417 = vld [vmem:[%s1 + $0x8] sm:$0xff]
  %v418 = vld [vmem:[%s1 + $0x10] sm:$0xff]
  %v419 = vld [vmem:[%s1 + $0x18] sm:$0xff]
  %v420 = vld [vmem:[%s1 + $0x20] sm:$0xff]
  %v421 = vld [vmem:[%s1 + $0x28] sm:$0xff]
  %v422 = vld [vmem:[%s1 + $0x30] sm:$0xff]
  %v423 = vld [vmem:[%s1 + $0x38] sm:$0xff]
  %v424 = vld [vmem:[%s1 + $0x40] sm:$0xff]
  %v425 = vld [vmem:[%s1 + $0x48] sm:$0xff]
  %v426 = vld [vmem:[%s1 + $0x50] sm:$0xff]
  %v427 = vld [vmem:[%s1 + $0x58] sm:$0xff]
  %v428 = vld [vmem:[%s1 + $0x60] sm:$0xff]
  %v429 = vld [vmem:[%s1 + $0x68] sm:$0xff]
  %v430 = vld [vmem:[%s1 + $0x70] sm:$0xff]
  %v431 = vld [vmem:[%s1 + $0x78] sm:$0xff]
  %v432 = vld [vmem:[%s1 + $0x80] sm:$0xff]
  %v433 = vld [vmem:[%s1 + $0x88] sm:$0xff]
  %v434 = vld [vmem:[%s1 + $0x90] sm:$0xff]
  %v435 = vld [vmem:[%s1 + $0x98] sm:$0xff]
  %v436 = vld [vmem:[%s1 + $0xa0] sm:$0xff]
  %v437 = vld [vmem:[%s1 + $0xa8] sm:$0xff]
  %v438 = vld [vmem:[%s1 + $0xb0] sm:$0xff]
  %v439 = vld [vmem:[%s1 + $0xb8] sm:$0xff]
  %v440 = vld [vmem:[%s1 + $0xc0] sm:$0xff]
  %v441 = vld [vmem:[%s1 + $0xc8] sm:$0xff]
  %v442 = vld [vmem:[%s1 + $0xd0] sm:$0xff]
  %v443 = vld [vmem:[%s1 + $0xd8] sm:$0xff]
  %v444 = vld [vmem:[%s1 + $0xe0] sm:$0xff]
  %v445 = vld [vmem:[%s1 + $0xe8] sm:$0xff]
  %v446 = vld [vmem:[%s1 + $0xf0] sm:$0xff]
  %v447 = vld [vmem:[%s1 + $0xf8] sm:$0xff]
  %v448 = vld [vmem:[%s1 + $0x100] sm:$0xff]
  %v449 = vld [vmem:[%s1 + $0x108] sm:$0xff]
  %v450 = vld [vmem:[%s1 + $0x110] sm:$0xff]
  %v451 = vld [vmem:[%s1 + $0x118] sm:$0xff]
  %v452 = vld [vmem:[%s1 + $0x120] sm:$0xff]
  %v453 = vld [vmem:[%s1 + $0x128] sm:$0xff]
  %v454 = vld [vmem:[%s1 + $0x130] sm:$0xff]
  %v455 = vld [vmem:[%s1 + $0x138] sm:$0xff]
  %v456 = vld [vmem:[%s1 + $0x140] sm:$0xff]
  %v457 = vld [vmem:[%s1 + $0x148] sm:$0xff]
  %v458 = vld [vmem:[%s1 + $0x150] sm:$0xff]
  %v459 = vld [vmem:[%s1 + $0x158] sm:$0xff]
  %v460 = vld [vmem:[%s1 + $0x160] sm:$0xff]
  %v461 = vld [vmem:[%s1 + $0x168] sm:$0xff]
  %v462 = vld [vmem:[%s1 + $0x170] sm:$0xff]
  %v463 = vld [vmem:[%s1 + $0x178] sm:$0xff]
  %v464 = vld [vmem:[%s1 + $0x180] sm:$0xff]
  %v465 = vld [vmem:[%s1 + $0x188] sm:$0xff]
  %v466 = vld [vmem:[%s1 + $0x190] sm:$0xff]
  %v467 = vld [vmem:[%s1 + $0x198] sm:$0xff]
  %v468 = vld [vmem:[%s1 + $0x1a0] sm:$0xff]
  %v469 = vld [vmem:[%s1 + $0x1a8] sm:$0xff]
  %v470 = vld [vmem:[%s1 + $0x1b0] sm:$0xff]
  %v471 = vld [vmem:[%s1 + $0x1b8] sm:$0xff]
  %v472 = vld [vmem:[%s1 + $0x1c0] sm:$0xff]
  %v473 = vld [vmem:[%s1 + $0x1c8] sm:$0xff]
  %v474 = vld [vmem:[%s1 + $0x1d0] sm:$0xff]
  %v475 = vld [vmem:[%s1 + $0x1d8] sm:$0xff]
  %v476 = vld [vmem:[%s1 + $0x1e0] sm:$0xff]
  %v477 = vld [vmem:[%s1 + $0x1e8] sm:$0xff]
  %v478 = vld [vmem:[%s1 + $0x1f0] sm:$0xff]
  %v479 = vld [vmem:[%s1 + $0x1f8] sm:$0xff]
  %v480 = vld [vmem:[%s1 + $0x200] sm:$0xff]
  %v481 = vld [vmem:[%s1 + $0x208] sm:$0xff]
  %v482 = vld [vmem:[%s1 + $0x210] sm:$0xff]
  %v483 = vld [vmem:[%s1 + $0x218] sm:$0xff]
  %v484 = vld [vmem:[%s1 + $0x220] sm:$0xff]
  %v485 = vld [vmem:[%s1 + $0x228] sm:$0xff]
  %v486 = vld [vmem:[%s1 + $0x230] sm:$0xff]
  %v487 = vld [vmem:[%s1 + $0x238] sm:$0xff]
  %v488 = vld [vmem:[%s1 + $0x240] sm:$0xff]
  %v489 = vld [vmem:[%s1 + $0x248] sm:$0xff]
  %v490 = vld [vmem:[%s1 + $0x250] sm:$0xff]
  %v491 = vld [vmem:[%s1 + $0x258] sm:$0xff]
  %v492 = vld [vmem:[%s1 + $0x260] sm:$0xff]
  %v493 = vld [vmem:[%s1 + $0x268] sm:$0xff]
  %v494 = vld [vmem:[%s1 + $0x270] sm:$0xff]
  %v495 = vld [vmem:[%s1 + $0x278] sm:$0xff]
  %v496 = vld [vmem:[%s1 + $0x280] sm:$0xff]
  %v497 = vld [vmem:[%s1 + $0x288] sm:$0xff]
  %v498 = vld [vmem:[%s1 + $0x290] sm:$0xff]
  %v499 = vld [vmem:[%s1 + $0x298] sm:$0xff]
  %v500 = vld [vmem:[%s1 + $0x2a0] sm:$0xff]
  %v501 = vld [vmem:[%s1 + $0x2a8] sm:$0xff]
  %v502 = vld [vmem:[%s1 + $0x2b0] sm:$0xff]
  %v503 = vld [vmem:[%s1 + $0x2b8] sm:$0xff]
  %v504 = vld [vmem:[%s1 + $0x2c0] sm:$0xff]
  %v505 = vld [vmem:[%s1 + $0x2c8] sm:$0xff]
  %v506 = vld [vmem:[%s1 + $0x2d0] sm:$0xff]
  %v507 = vld [vmem:[%s1 + $0x2d8] sm:$0xff]
  %v508 = vld [vmem:[%s1 + $0x2e0] sm:$0xff]
  %v509 = vld [vmem:[%s1 + $0x2e8] sm:$0xff]
  %v510 = vld [vmem:[%s1 + $0x2f0] sm:$0xff]
  %v511 = vld [vmem:[%s1 + $0x2f8] sm:$0xff]
  %v512 = vld [vmem:[%s1 + $0x300] sm:$0xff]
  %v513 = vld [vmem:[%s1 + $0x308] sm:$0xff]
  %v514 = vld [vmem:[%s1 + $0x310] sm:$0xff]
  %v515 = vld [vmem:[%s1 + $0x318] sm:$0xff]
  %v516 = vld [vmem:[%s1 + $0x320] sm:$0xff]
  %v517 = vld [vmem:[%s1 + $0x328] sm:$0xff]
  %v518 = vld [vmem:[%s1 + $0x330] sm:$0xff]
  %v519 = vld [vmem:[%s1 + $0x338] sm:$0xff]
  %v520 = vld [vmem:[%s1 + $0x340] sm:$0xff]
  %v521 = vld [vmem:[%s1 + $0x348] sm:$0xff]
  %v522 = vld [vmem:[%s1 + $0x350] sm:$0xff]
  %v523 = vld [vmem:[%s1 + $0x358] sm:$0xff]
  %v524 = vld [vmem:[%s1 + $0x360] sm:$0xff]
  %v525 = vld [vmem:[%s1 + $0x368] sm:$0xff]
  %v526 = vld [vmem:[%s1 + $0x370] sm:$0xff]
  %v527 = vld [vmem:[%s1 + $0x378] sm:$0xff]
  %v528 = vld [vmem:[%s1 + $0x380] sm:$0xff]
  %v529 = vld [vmem:[%s1 + $0x388] sm:$0xff]
  %v530 = vld [vmem:[%s1 + $0x390] sm:$0xff]
  %v531 = vld [vmem:[%s1 + $0x398] sm:$0xff]
  %v532 = vld [vmem:[%s1 + $0x3a0] sm:$0xff]
  %v533 = vld [vmem:[%s1 + $0x3a8] sm:$0xff]
  %v534 = vld [vmem:[%s1 + $0x3b0] sm:$0xff]
  %v535 = vld [vmem:[%s1 + $0x3b8] sm:$0xff]
  %v536 = vld [vmem:[%s1 + $0x3c0] sm:$0xff]
  %v537 = vld [vmem:[%s1 + $0x3c8] sm:$0xff]
  %v538 = vld [vmem:[%s1 + $0x3d0] sm:$0xff]
  %v539 = vld [vmem:[%s1 + $0x3d8] sm:$0xff]
  %v540 = vld [vmem:[%s1 + $0x3e0] sm:$0xff]
  %v541 = vld [vmem:[%s1 + $0x3e8] sm:$0xff]
  %v542 = vld [vmem:[%s1 + $0x3f0] sm:$0xff]
  %v543 = vld [vmem:[%s1 + $0x3f8] sm:$0xff]
  %v544 = vld [vmem:[%s2] sm:$0xf]
  %v546 = vperm.slane %v544, 0
  %v547 = vperm.slane %v544, 1
  %v548 = vperm.slane %v544, 2
  %v549 = vperm.slane %v544, 3
  %554 = vmatpush.msra.mxu0 %v476
  %555 = vmatpush.msra.mxu0 %v472
  %556 = vmatpush.msra.mxu0 %v468
  %557 = vmatpush.msra.mxu0 %v464
  %558 = vmatpush.msra.mxu0 %v460
  %559 = vmatpush.msra.mxu0 %v456
  %560 = vmatpush.msra.mxu0 %v452
  %561 = vmatpush.msra.mxu0 %v448
  %562 = vmatpush.msra.mxu0 %v444
  %563 = vmatpush.msra.mxu0 %v440
  %564 = vmatpush.msra.mxu0 %v436
  %565 = vmatpush.msra.mxu0 %v432
  %566 = vmatpush.msra.mxu0 %v428
  %567 = vmatpush.msra.mxu0 %v424
  %568 = vmatpush.msra.mxu0 %v420
  %569 = vmatpush.msra.mxu0 %v416
  %570 = vmatmul.f32.gmra.mxu0 %v408
  %v571 = vpop.f32.mrf.mxu0
  %v572 = vadd.f32 %v546, %v571
  %573 = vmatmul.f32.gmra.mxu0 %v410
  %v574 = vpop.f32.mrf.mxu0
  %v575 = vadd.f32 %v546, %v574
  %576 = vmatmul.f32.gmra.mxu0 %v412
  %v577 = vpop.f32.mrf.mxu0
  %v578 = vadd.f32 %v546, %v577
  %579 = vmatmul.f32.gmra.mxu0 %v414
  %v580 = vpop.f32.mrf.mxu0
  %v581 = vadd.f32 %v546, %v580
  %582 = vdwg.mxu0
  %583 = vmatpush.msra.mxu0 %v540
  %584 = vmatpush.msra.mxu0 %v536
  %585 = vmatpush.msra.mxu0 %v532
  %586 = vmatpush.msra.mxu0 %v528
  %587 = vmatpush.msra.mxu0 %v524
  %588 = vmatpush.msra.mxu0 %v520
  %589 = vmatpush.msra.mxu0 %v516
  %590 = vmatpush.msra.mxu0 %v512
  %591 = vmatpush.msra.mxu0 %v508
  %592 = vmatpush.msra.mxu0 %v504
  %593 = vmatpush.msra.mxu0 %v500
  %594 = vmatpush.msra.mxu0 %v496
  %595 = vmatpush.msra.mxu0 %v492
  %596 = vmatpush.msra.mxu0 %v488
  %597 = vmatpush.msra.mxu0 %v484
  %598 = vmatpush.msra.mxu0 %v480
  %599 = vmatmul.f32.gmra.mxu0 %v409
  %v600 = vpop.f32.mrf.mxu0
  %v601 = vadd.f32 %v572, %v600
  %602 = vmatmul.f32.gmra.mxu0 %v411
  %v603 = vpop.f32.mrf.mxu0
  %v604 = vadd.f32 %v575, %v603
  %605 = vmatmul.f32.gmra.mxu0 %v413
  %v606 = vpop.f32.mrf.mxu0
  %v607 = vadd.f32 %v578, %v606
  %608 = vmatmul.f32.gmra.mxu0 %v415
  %v609 = vpop.f32.mrf.mxu0
  %v610 = vadd.f32 %v581, %v609
  %611 = vdwg.mxu0
  %612 = vmatpush.msra.mxu0 %v477
  %613 = vmatpush.msra.mxu0 %v473
  %614 = vmatpush.msra.mxu0 %v469
  %615 = vmatpush.msra.mxu0 %v465
  %616 = vmatpush.msra.mxu0 %v461
  %617 = vmatpush.msra.mxu0 %v457
  %618 = vmatpush.msra.mxu0 %v453
  %619 = vmatpush.msra.mxu0 %v449
  %620 = vmatpush.msra.mxu0 %v445
  %621 = vmatpush.msra.mxu0 %v441
  %622 = vmatpush.msra.mxu0 %v437
  %623 = vmatpush.msra.mxu0 %v433
  %624 = vmatpush.msra.mxu0 %v429
  %625 = vmatpush.msra.mxu0 %v425
  %626 = vmatpush.msra.mxu0 %v421
  %627 = vmatpush.msra.mxu0 %v417
  %628 = vmatmul.f32.gmra.mxu0 %v408
  %v629 = vpop.f32.mrf.mxu0
  %v630 = vadd.f32 %v547, %v629
  %631 = vmatmul.f32.gmra.mxu0 %v410
  %v632 = vpop.f32.mrf.mxu0
  %v633 = vadd.f32 %v547, %v632
  %634 = vmatmul.f32.gmra.mxu0 %v412
  %v635 = vpop.f32.mrf.mxu0
  %v636 = vadd.f32 %v547, %v635
  %637 = vmatmul.f32.gmra.mxu0 %v414
  %v638 = vpop.f32.mrf.mxu0
  %v639 = vadd.f32 %v547, %v638
  %640 = vdwg.mxu0
  %641 = vmatpush.msra.mxu0 %v541
  %642 = vmatpush.msra.mxu0 %v537
  %643 = vmatpush.msra.mxu0 %v533
  %644 = vmatpush.msra.mxu0 %v529
  %645 = vmatpush.msra.mxu0 %v525
  %646 = vmatpush.msra.mxu0 %v521
  %647 = vmatpush.msra.mxu0 %v517
  %648 = vmatpush.msra.mxu0 %v513
  %649 = vmatpush.msra.mxu0 %v509
  %650 = vmatpush.msra.mxu0 %v505
  %651 = vmatpush.msra.mxu0 %v501
  %652 = vmatpush.msra.mxu0 %v497
  %653 = vmatpush.msra.mxu0 %v493
  %654 = vmatpush.msra.mxu0 %v489
  %655 = vmatpush.msra.mxu0 %v485
  %656 = vmatpush.msra.mxu0 %v481
  %657 = vmatmul.f32.gmra.mxu0 %v409
  %v658 = vpop.f32.mrf.mxu0
  %v659 = vadd.f32 %v630, %v658
  %660 = vmatmul.f32.gmra.mxu0 %v411
  %v661 = vpop.f32.mrf.mxu0
  %v662 = vadd.f32 %v633, %v661
  %663 = vmatmul.f32.gmra.mxu0 %v413
  %v664 = vpop.f32.mrf.mxu0
  %v665 = vadd.f32 %v636, %v664
  %666 = vmatmul.f32.gmra.mxu0 %v415
  %v667 = vpop.f32.mrf.mxu0
  %v668 = vadd.f32 %v639, %v667
  %669 = vdwg.mxu0
  %670 = vmatpush.msra.mxu0 %v478
  %671 = vmatpush.msra.mxu0 %v474
  %672 = vmatpush.msra.mxu0 %v470
  %673 = vmatpush.msra.mxu0 %v466
  %674 = vmatpush.msra.mxu0 %v462
  %675 = vmatpush.msra.mxu0 %v458
  %676 = vmatpush.msra.mxu0 %v454
  %677 = vmatpush.msra.mxu0 %v450
  %678 = vmatpush.msra.mxu0 %v446
  %679 = vmatpush.msra.mxu0 %v442
  %680 = vmatpush.msra.mxu0 %v438
  %681 = vmatpush.msra.mxu0 %v434
  %682 = vmatpush.msra.mxu0 %v430
  %683 = vmatpush.msra.mxu0 %v426
  %684 = vmatpush.msra.mxu0 %v422
  %685 = vmatpush.msra.mxu0 %v418
  %686 = vmatmul.f32.gmra.mxu0 %v408
  %v687 = vpop.f32.mrf.mxu0
  %v688 = vadd.f32 %v548, %v687
  %689 = vmatmul.f32.gmra.mxu0 %v410
  %v690 = vpop.f32.mrf.mxu0
  %v691 = vadd.f32 %v548, %v690
  %692 = vmatmul.f32.gmra.mxu0 %v412
  %v693 = vpop.f32.mrf.mxu0
  %v694 = vadd.f32 %v548, %v693
  %695 = vmatmul.f32.gmra.mxu0 %v414
  %v696 = vpop.f32.mrf.mxu0
  %v697 = vadd.f32 %v548, %v696
  %698 = vdwg.mxu0
  %699 = vmatpush.msra.mxu0 %v542
  %700 = vmatpush.msra.mxu0 %v538
  %701 = vmatpush.msra.mxu0 %v534
  %702 = vmatpush.msra.mxu0 %v530
  %703 = vmatpush.msra.mxu0 %v526
  %704 = vmatpush.msra.mxu0 %v522
  %705 = vmatpush.msra.mxu0 %v518
  %706 = vmatpush.msra.mxu0 %v514
  %707 = vmatpush.msra.mxu0 %v510
  %708 = vmatpush.msra.mxu0 %v506
  %709 = vmatpush.msra.mxu0 %v502
  %710 = vmatpush.msra.mxu0 %v498
  %711 = vmatpush.msra.mxu0 %v494
  %712 = vmatpush.msra.mxu0 %v490
  %713 = vmatpush.msra.mxu0 %v486
  %714 = vmatpush.msra.mxu0 %v482
  %715 = vmatmul.f32.gmra.mxu0 %v409
  %v716 = vpop.f32.mrf.mxu0
  %v717 = vadd.f32 %v688, %v716
  %718 = vmatmul.f32.gmra.mxu0 %v411
  %v719 = vpop.f32.mrf.mxu0
  %v720 = vadd.f32 %v691, %v719
  %721 = vmatmul.f32.gmra.mxu0 %v413
  %v722 = vpop.f32.mrf.mxu0
  %v723 = vadd.f32 %v694, %v722
  %724 = vmatmul.f32.gmra.mxu0 %v415
  %v725 = vpop.f32.mrf.mxu0
  %v726 = vadd.f32 %v697, %v725
  %727 = vdwg.mxu0
  %728 = vmatpush.msra.mxu0 %v479
  %729 = vmatpush.msra.mxu0 %v475
  %730 = vmatpush.msra.mxu0 %v471
  %731 = vmatpush.msra.mxu0 %v467
  %732 = vmatpush.msra.mxu0 %v463
  %733 = vmatpush.msra.mxu0 %v459
  %734 = vmatpush.msra.mxu0 %v455
  %735 = vmatpush.msra.mxu0 %v451
  %736 = vmatpush.msra.mxu0 %v447
  %737 = vmatpush.msra.mxu0 %v443
  %738 = vmatpush.msra.mxu0 %v439
  %739 = vmatpush.msra.mxu0 %v435
  %740 = vmatpush.msra.mxu0 %v431
  %741 = vmatpush.msra.mxu0 %v427
  %742 = vmatpush.msra.mxu0 %v423
  %743 = vmatpush.msra.mxu0 %v419
  %744 = vmatmul.f32.gmra.mxu0 %v408
  %v745 = vpop.f32.mrf.mxu0
  %v746 = vadd.f32 %v549, %v745
  %747 = vmatmul.f32.gmra.mxu0 %v410
  %v748 = vpop.f32.mrf.mxu0
  %v749 = vadd.f32 %v549, %v748
  %750 = vmatmul.f32.gmra.mxu0 %v412
  %v751 = vpop.f32.mrf.mxu0
  %v752 = vadd.f32 %v549, %v751
  %753 = vmatmul.f32.gmra.mxu0 %v414
  %v754 = vpop.f32.mrf.mxu0
  %v755 = vadd.f32 %v549, %v754
  %756 = vdwg.mxu0
  %757 = vmatpush.msra.mxu0 %v543
  %758 = vmatpush.msra.mxu0 %v539
  %759 = vmatpush.msra.mxu0 %v535
  %760 = vmatpush.msra.mxu0 %v531
  %761 = vmatpush.msra.mxu0 %v527
  %762 = vmatpush.msra.mxu0 %v523
  %763 = vmatpush.msra.mxu0 %v519
  %764 = vmatpush.msra.mxu0 %v515
  %765 = vmatpush.msra.mxu0 %v511
  %766 = vmatpush.msra.mxu0 %v507
  %767 = vmatpush.msra.mxu0 %v503
  %768 = vmatpush.msra.mxu0 %v499
  %769 = vmatpush.msra.mxu0 %v495
  %770 = vmatpush.msra.mxu0 %v491
  %771 = vmatpush.msra.mxu0 %v487
  %772 = vmatpush.msra.mxu0 %v483
  %773 = vmatmul.f32.gmra.mxu0 %v409
  %v774 = vpop.f32.mrf.mxu0
  %v775 = vadd.f32 %v746, %v774
  %776 = vmatmul.f32.gmra.mxu0 %v411
  %v777 = vpop.f32.mrf.mxu0
  %v778 = vadd.f32 %v749, %v777
  %779 = vmatmul.f32.gmra.mxu0 %v413
  %v780 = vpop.f32.mrf.mxu0
  %v781 = vadd.f32 %v752, %v780
  %782 = vmatmul.f32.gmra.mxu0 %v415
  %v783 = vpop.f32.mrf.mxu0
  %v784 = vadd.f32 %v755, %v783
  %785 = vdwg.mxu0
  %786 = vst [vmem:[%s3 + $0x20] sm:$0xff] %v601
  %787 = vst [vmem:[%s3 + $0x28] sm:$0xff] %v659
  %788 = vst [vmem:[%s3 + $0x30] sm:$0xff] %v717
  %789 = vst [vmem:[%s3 + $0x38] sm:$0xff] %v775
  %790 = vst [vmem:[%s3 + $0xe0] sm:$0xff] %v604
  %791 = vst [vmem:[%s3 + $0xe8] sm:$0xff] %v662
  %792 = vst [vmem:[%s3 + $0xf0] sm:$0xff] %v720
  %793 = vst [vmem:[%s3 + $0xf8] sm:$0xff] %v778
  %794 = vst [vmem:[%s3 + $0x1a0] sm:$0xff] %v607
  %795 = vst [vmem:[%s3 + $0x1a8] sm:$0xff] %v665
  %796 = vst [vmem:[%s3 + $0x1b0] sm:$0xff] %v723
  %797 = vst [vmem:[%s3 + $0x1b8] sm:$0xff] %v781
  %798 = vst [vmem:[%s3 + $0x260] sm:$0xff] %v610
  %799 = vst [vmem:[%s3 + $0x268] sm:$0xff] %v668
  %800 = vst [vmem:[%s3 + $0x270] sm:$0xff] %v726
  %801 = vst [vmem:[%s3 + $0x278] sm:$0xff] %v784
  %v802 = vld [vmem:[%s0 + $0x20] sm:$0xff]
  %v803 = vld [vmem:[%s0 + $0x28] sm:$0xff]
  %v804 = vld [vmem:[%s0 + $0x80] sm:$0xff]
  %v805 = vld [vmem:[%s0 + $0x88] sm:$0xff]
  %v806 = vld [vmem:[%s0 + $0xe0] sm:$0xff]
  %v807 = vld [vmem:[%s0 + $0xe8] sm:$0xff]
  %v808 = vld [vmem:[%s0 + $0x140] sm:$0xff]
  %v809 = vld [vmem:[%s0 + $0x148] sm:$0xff]
  %v810 = vld [vmem:[%s1] sm:$0xff]
  %v811 = vld [vmem:[%s1 + $0x8] sm:$0xff]
  %v812 = vld [vmem:[%s1 + $0x10] sm:$0xff]
  %v813 = vld [vmem:[%s1 + $0x18] sm:$0xff]
  %v814 = vld [vmem:[%s1 + $0x20] sm:$0xff]
  %v815 = vld [vmem:[%s1 + $0x28] sm:$0xff]
  %v816 = vld [vmem:[%s1 + $0x30] sm:$0xff]
  %v817 = vld [vmem:[%s1 + $0x38] sm:$0xff]
  %v818 = vld [vmem:[%s1 + $0x40] sm:$0xff]
  %v819 = vld [vmem:[%s1 + $0x48] sm:$0xff]
  %v820 = vld [vmem:[%s1 + $0x50] sm:$0xff]
  %v821 = vld [vmem:[%s1 + $0x58] sm:$0xff]
  %v822 = vld [vmem:[%s1 + $0x60] sm:$0xff]
  %v823 = vld [vmem:[%s1 + $0x68] sm:$0xff]
  %v824 = vld [vmem:[%s1 + $0x70] sm:$0xff]
  %v825 = vld [vmem:[%s1 + $0x78] sm:$0xff]
  %v826 = vld [vmem:[%s1 + $0x80] sm:$0xff]
  %v827 = vld [vmem:[%s1 + $0x88] sm:$0xff]
  %v828 = vld [vmem:[%s1 + $0x90] sm:$0xff]
  %v829 = vld [vmem:[%s1 + $0x98] sm:$0xff]
  %v830 = vld [vmem:[%s1 + $0xa0] sm:$0xff]
  %v831 = vld [vmem:[%s1 + $0xa8] sm:$0xff]
  %v832 = vld [vmem:[%s1 + $0xb0] sm:$0xff]
  %v833 = vld [vmem:[%s1 + $0xb8] sm:$0xff]
  %v834 = vld [vmem:[%s1 + $0xc0] sm:$0xff]
  %v835 = vld [vmem:[%s1 + $0xc8] sm:$0xff]
  %v836 = vld [vmem:[%s1 + $0xd0] sm:$0xff]
  %v837 = vld [vmem:[%s1 + $0xd8] sm:$0xff]
  %v838 = vld [vmem:[%s1 + $0xe0] sm:$0xff]
  %v839 = vld [vmem:[%s1 + $0xe8] sm:$0xff]
  %v840 = vld [vmem:[%s1 + $0xf0] sm:$0xff]
  %v841 = vld [vmem:[%s1 + $0xf8] sm:$0xff]
  %v842 = vld [vmem:[%s1 + $0x100] sm:$0xff]
  %v843 = vld [vmem:[%s1 + $0x108] sm:$0xff]
  %v844 = vld [vmem:[%s1 + $0x110] sm:$0xff]
  %v845 = vld [vmem:[%s1 + $0x118] sm:$0xff]
  %v846 = vld [vmem:[%s1 + $0x120] sm:$0xff]
  %v847 = vld [vmem:[%s1 + $0x128] sm:$0xff]
  %v848 = vld [vmem:[%s1 + $0x130] sm:$0xff]
  %v849 = vld [vmem:[%s1 + $0x138] sm:$0xff]
  %v850 = vld [vmem:[%s1 + $0x140] sm:$0xff]
  %v851 = vld [vmem:[%s1 + $0x148] sm:$0xff]
  %v852 = vld [vmem:[%s1 + $0x150] sm:$0xff]
  %v853 = vld [vmem:[%s1 + $0x158] sm:$0xff]
  %v854 = vld [vmem:[%s1 + $0x160] sm:$0xff]
  %v855 = vld [vmem:[%s1 + $0x168] sm:$0xff]
  %v856 = vld [vmem:[%s1 + $0x170] sm:$0xff]
  %v857 = vld [vmem:[%s1 + $0x178] sm:$0xff]
  %v858 = vld [vmem:[%s1 + $0x180] sm:$0xff]
  %v859 = vld [vmem:[%s1 + $0x188] sm:$0xff]
  %v860 = vld [vmem:[%s1 + $0x190] sm:$0xff]
  %v861 = vld [vmem:[%s1 + $0x198] sm:$0xff]
  %v862 = vld [vmem:[%s1 + $0x1a0] sm:$0xff]
  %v863 = vld [vmem:[%s1 + $0x1a8] sm:$0xff]
  %v864 = vld [vmem:[%s1 + $0x1b0] sm:$0xff]
  %v865 = vld [vmem:[%s1 + $0x1b8] sm:$0xff]
  %v866 = vld [vmem:[%s1 + $0x1c0] sm:$0xff]
  %v867 = vld [vmem:[%s1 + $0x1c8] sm:$0xff]
  %v868 = vld [vmem:[%s1 + $0x1d0] sm:$0xff]
  %v869 = vld [vmem:[%s1 + $0x1d8] sm:$0xff]
  %v870 = vld [vmem:[%s1 + $0x1e0] sm:$0xff]
  %v871 = vld [vmem:[%s1 + $0x1e8] sm:$0xff]
  %v872 = vld [vmem:[%s1 + $0x1f0] sm:$0xff]
  %v873 = vld [vmem:[%s1 + $0x1f8] sm:$0xff]
  %v874 = vld [vmem:[%s1 + $0x200] sm:$0xff]
  %v875 = vld [vmem:[%s1 + $0x208] sm:$0xff]
  %v876 = vld [vmem:[%s1 + $0x210] sm:$0xff]
  %v877 = vld [vmem:[%s1 + $0x218] sm:$0xff]
  %v878 = vld [vmem:[%s1 + $0x220] sm:$0xff]
  %v879 = vld [vmem:[%s1 + $0x228] sm:$0xff]
  %v880 = vld [vmem:[%s1 + $0x230] sm:$0xff]
  %v881 = vld [vmem:[%s1 + $0x238] sm:$0xff]
  %v882 = vld [vmem:[%s1 + $0x240] sm:$0xff]
  %v883 = vld [vmem:[%s1 + $0x248] sm:$0xff]
  %v884 = vld [vmem:[%s1 + $0x250] sm:$0xff]
  %v885 = vld [vmem:[%s1 + $0x258] sm:$0xff]
  %v886 = vld [vmem:[%s1 + $0x260] sm:$0xff]
  %v887 = vld [vmem:[%s1 + $0x268] sm:$0xff]
  %v888 = vld [vmem:[%s1 + $0x270] sm:$0xff]
  %v889 = vld [vmem:[%s1 + $0x278] sm:$0xff]
  %v890 = vld [vmem:[%s1 + $0x280] sm:$0xff]
  %v891 = vld [vmem:[%s1 + $0x288] sm:$0xff]
  %v892 = vld [vmem:[%s1 + $0x290] sm:$0xff]
  %v893 = vld [vmem:[%s1 + $0x298] sm:$0xff]
  %v894 = vld [vmem:[%s1 + $0x2a0] sm:$0xff]
  %v895 = vld [vmem:[%s1 + $0x2a8] sm:$0xff]
  %v896 = vld [vmem:[%s1 + $0x2b0] sm:$0xff]
  %v897 = vld [vmem:[%s1 + $0x2b8] sm:$0xff]
  %v898 = vld [vmem:[%s1 + $0x2c0] sm:$0xff]
  %v899 = vld [vmem:[%s1 + $0x2c8] sm:$0xff]
  %v900 = vld [vmem:[%s1 + $0x2d0] sm:$0xff]
  %v901 = vld [vmem:[%s1 + $0x2d8] sm:$0xff]
  %v902 = vld [vmem:[%s1 + $0x2e0] sm:$0xff]
  %v903 = vld [vmem:[%s1 + $0x2e8] sm:$0xff]
  %v904 = vld [vmem:[%s1 + $0x2f0] sm:$0xff]
  %v905 = vld [vmem:[%s1 + $0x2f8] sm:$0xff]
  %v906 = vld [vmem:[%s1 + $0x300] sm:$0xff]
  %v907 = vld [vmem:[%s1 + $0x308] sm:$0xff]
  %v908 = vld [vmem:[%s1 + $0x310] sm:$0xff]
  %v909 = vld [vmem:[%s1 + $0x318] sm:$0xff]
  %v910 = vld [vmem:[%s1 + $0x320] sm:$0xff]
  %v911 = vld [vmem:[%s1 + $0x328] sm:$0xff]
  %v912 = vld [vmem:[%s1 + $0x330] sm:$0xff]
  %v913 = vld [vmem:[%s1 + $0x338] sm:$0xff]
  %v914 = vld [vmem:[%s1 + $0x340] sm:$0xff]
  %v915 = vld [vmem:[%s1 + $0x348] sm:$0xff]
  %v916 = vld [vmem:[%s1 + $0x350] sm:$0xff]
  %v917 = vld [vmem:[%s1 + $0x358] sm:$0xff]
  %v918 = vld [vmem:[%s1 + $0x360] sm:$0xff]
  %v919 = vld [vmem:[%s1 + $0x368] sm:$0xff]
  %v920 = vld [vmem:[%s1 + $0x370] sm:$0xff]
  %v921 = vld [vmem:[%s1 + $0x378] sm:$0xff]
  %v922 = vld [vmem:[%s1 + $0x380] sm:$0xff]
  %v923 = vld [vmem:[%s1 + $0x388] sm:$0xff]
  %v924 = vld [vmem:[%s1 + $0x390] sm:$0xff]
  %v925 = vld [vmem:[%s1 + $0x398] sm:$0xff]
  %v926 = vld [vmem:[%s1 + $0x3a0] sm:$0xff]
  %v927 = vld [vmem:[%s1 + $0x3a8] sm:$0xff]
  %v928 = vld [vmem:[%s1 + $0x3b0] sm:$0xff]
  %v929 = vld [vmem:[%s1 + $0x3b8] sm:$0xff]
  %v930 = vld [vmem:[%s1 + $0x3c0] sm:$0xff]
  %v931 = vld [vmem:[%s1 + $0x3c8] sm:$0xff]
  %v932 = vld [vmem:[%s1 + $0x3d0] sm:$0xff]
  %v933 = vld [vmem:[%s1 + $0x3d8] sm:$0xff]
  %v934 = vld [vmem:[%s1 + $0x3e0] sm:$0xff]
  %v935 = vld [vmem:[%s1 + $0x3e8] sm:$0xff]
  %v936 = vld [vmem:[%s1 + $0x3f0] sm:$0xff]
  %v937 = vld [vmem:[%s1 + $0x3f8] sm:$0xff]
  %v938 = vld [vmem:[%s2] sm:$0xf]
  %v940 = vperm.slane %v938, 0
  %v941 = vperm.slane %v938, 1
  %v942 = vperm.slane %v938, 2
  %v943 = vperm.slane %v938, 3
  %948 = vmatpush.msra.mxu0 %v870
  %949 = vmatpush.msra.mxu0 %v866
  %950 = vmatpush.msra.mxu0 %v862
  %951 = vmatpush.msra.mxu0 %v858
  %952 = vmatpush.msra.mxu0 %v854
  %953 = vmatpush.msra.mxu0 %v850
  %954 = vmatpush.msra.mxu0 %v846
  %955 = vmatpush.msra.mxu0 %v842
  %956 = vmatpush.msra.mxu0 %v838
  %957 = vmatpush.msra.mxu0 %v834
  %958 = vmatpush.msra.mxu0 %v830
  %959 = vmatpush.msra.mxu0 %v826
  %960 = vmatpush.msra.mxu0 %v822
  %961 = vmatpush.msra.mxu0 %v818
  %962 = vmatpush.msra.mxu0 %v814
  %963 = vmatpush.msra.mxu0 %v810
  %964 = vmatmul.f32.gmra.mxu0 %v802
  %v965 = vpop.f32.mrf.mxu0
  %v966 = vadd.f32 %v940, %v965
  %967 = vmatmul.f32.gmra.mxu0 %v804
  %v968 = vpop.f32.mrf.mxu0
  %v969 = vadd.f32 %v940, %v968
  %970 = vmatmul.f32.gmra.mxu0 %v806
  %v971 = vpop.f32.mrf.mxu0
  %v972 = vadd.f32 %v940, %v971
  %973 = vmatmul.f32.gmra.mxu0 %v808
  %v974 = vpop.f32.mrf.mxu0
  %v975 = vadd.f32 %v940, %v974
  %976 = vdwg.mxu0
  %977 = vmatpush.msra.mxu0 %v934
  %978 = vmatpush.msra.mxu0 %v930
  %979 = vmatpush.msra.mxu0 %v926
  %980 = vmatpush.msra.mxu0 %v922
  %981 = vmatpush.msra.mxu0 %v918
  %982 = vmatpush.msra.mxu0 %v914
  %983 = vmatpush.msra.mxu0 %v910
  %984 = vmatpush.msra.mxu0 %v906
  %985 = vmatpush.msra.mxu0 %v902
  %986 = vmatpush.msra.mxu0 %v898
  %987 = vmatpush.msra.mxu0 %v894
  %988 = vmatpush.msra.mxu0 %v890
  %989 = vmatpush.msra.mxu0 %v886
  %990 = vmatpush.msra.mxu0 %v882
  %991 = vmatpush.msra.mxu0 %v878
  %992 = vmatpush.msra.mxu0 %v874
  %993 = vmatmul.f32.gmra.mxu0 %v803
  %v994 = vpop.f32.mrf.mxu0
  %v995 = vadd.f32 %v966, %v994
  %996 = vmatmul.f32.gmra.mxu0 %v805
  %v997 = vpop.f32.mrf.mxu0
  %v998 = vadd.f32 %v969, %v997
  %999 = vmatmul.f32.gmra.mxu0 %v807
  %v1000 = vpop.f32.mrf.mxu0
  %v1001 = vadd.f32 %v972, %v1000
  %1002 = vmatmul.f32.gmra.mxu0 %v809
  %v1003 = vpop.f32.mrf.mxu0
  %v1004 = vadd.f32 %v975, %v1003
  %1005 = vdwg.mxu0
  %1006 = vmatpush.msra.mxu0 %v871
  %1007 = vmatpush.msra.mxu0 %v867
  %1008 = vmatpush.msra.mxu0 %v863
  %1009 = vmatpush.msra.mxu0 %v859
  %1010 = vmatpush.msra.mxu0 %v855
  %1011 = vmatpush.msra.mxu0 %v851
  %1012 = vmatpush.msra.mxu0 %v847
  %1013 = vmatpush.msra.mxu0 %v843
  %1014 = vmatpush.msra.mxu0 %v839
  %1015 = vmatpush.msra.mxu0 %v835
  %1016 = vmatpush.msra.mxu0 %v831
  %1017 = vmatpush.msra.mxu0 %v827
  %1018 = vmatpush.msra.mxu0 %v823
  %1019 = vmatpush.msra.mxu0 %v819
  %1020 = vmatpush.msra.mxu0 %v815
  %1021 = vmatpush.msra.mxu0 %v811
  %1022 = vmatmul.f32.gmra.mxu0 %v802
  %v1023 = vpop.f32.mrf.mxu0
  %v1024 = vadd.f32 %v941, %v1023
  %1025 = vmatmul.f32.gmra.mxu0 %v804
  %v1026 = vpop.f32.mrf.mxu0
  %v1027 = vadd.f32 %v941, %v1026
  %1028 = vmatmul.f32.gmra.mxu0 %v806
  %v1029 = vpop.f32.mrf.mxu0
  %v1030 = vadd.f32 %v941, %v1029
  %1031 = vmatmul.f32.gmra.mxu0 %v808
  %v1032 = vpop.f32.mrf.mxu0
  %v1033 = vadd.f32 %v941, %v1032
  %1034 = vdwg.mxu0
  %1035 = vmatpush.msra.mxu0 %v935
  %1036 = vmatpush.msra.mxu0 %v931
  %1037 = vmatpush.msra.mxu0 %v927
  %1038 = vmatpush.msra.mxu0 %v923
  %1039 = vmatpush.msra.mxu0 %v919
  %1040 = vmatpush.msra.mxu0 %v915
  %1041 = vmatpush.msra.mxu0 %v911
  %1042 = vmatpush.msra.mxu0 %v907
  %1043 = vmatpush.msra.mxu0 %v903
  %1044 = vmatpush.msra.mxu0 %v899
  %1045 = vmatpush.msra.mxu0 %v895
  %1046 = vmatpush.msra.mxu0 %v891
  %1047 = vmatpush.msra.mxu0 %v887
  %1048 = vmatpush.msra.mxu0 %v883
  %1049 = vmatpush.msra.mxu0 %v879
  %1050 = vmatpush.msra.mxu0 %v875
  %1051 = vmatmul.f32.gmra.mxu0 %v803
  %v1052 = vpop.f32.mrf.mxu0
  %v1053 = vadd.f32 %v1024, %v1052
  %1054 = vmatmul.f32.gmra.mxu0 %v805
  %v1055 = vpop.f32.mrf.mxu0
  %v1056 = vadd.f32 %v1027, %v1055
  %1057 = vmatmul.f32.gmra.mxu0 %v807
  %v1058 = vpop.f32.mrf.mxu0
  %v1059 = vadd.f32 %v1030, %v1058
  %1060 = vmatmul.f32.gmra.mxu0 %v809
  %v1061 = vpop.f32.mrf.mxu0
  %v1062 = vadd.f32 %v1033, %v1061
  %1063 = vdwg.mxu0
  %1064 = vmatpush.msra.mxu0 %v872
  %1065 = vmatpush.msra.mxu0 %v868
  %1066 = vmatpush.msra.mxu0 %v864
  %1067 = vmatpush.msra.mxu0 %v860
  %1068 = vmatpush.msra.mxu0 %v856
  %1069 = vmatpush.msra.mxu0 %v852
  %1070 = vmatpush.msra.mxu0 %v848
  %1071 = vmatpush.msra.mxu0 %v844
  %1072 = vmatpush.msra.mxu0 %v840
  %1073 = vmatpush.msra.mxu0 %v836
  %1074 = vmatpush.msra.mxu0 %v832
  %1075 = vmatpush.msra.mxu0 %v828
  %1076 = vmatpush.msra.mxu0 %v824
  %1077 = vmatpush.msra.mxu0 %v820
  %1078 = vmatpush.msra.mxu0 %v816
  %1079 = vmatpush.msra.mxu0 %v812
  %1080 = vmatmul.f32.gmra.mxu0 %v802
  %v1081 = vpop.f32.mrf.mxu0
  %v1082 = vadd.f32 %v942, %v1081
  %1083 = vmatmul.f32.gmra.mxu0 %v804
  %v1084 = vpop.f32.mrf.mxu0
  %v1085 = vadd.f32 %v942, %v1084
  %1086 = vmatmul.f32.gmra.mxu0 %v806
  %v1087 = vpop.f32.mrf.mxu0
  %v1088 = vadd.f32 %v942, %v1087
  %1089 = vmatmul.f32.gmra.mxu0 %v808
  %v1090 = vpop.f32.mrf.mxu0
  %v1091 = vadd.f32 %v942, %v1090
  %1092 = vdwg.mxu0
  %1093 = vmatpush.msra.mxu0 %v936
  %1094 = vmatpush.msra.mxu0 %v932
  %1095 = vmatpush.msra.mxu0 %v928
  %1096 = vmatpush.msra.mxu0 %v924
  %1097 = vmatpush.msra.mxu0 %v920
  %1098 = vmatpush.msra.mxu0 %v916
  %1099 = vmatpush.msra.mxu0 %v912
  %1100 = vmatpush.msra.mxu0 %v908
  %1101 = vmatpush.msra.mxu0 %v904
  %1102 = vmatpush.msra.mxu0 %v900
  %1103 = vmatpush.msra.mxu0 %v896
  %1104 = vmatpush.msra.mxu0 %v892
  %1105 = vmatpush.msra.mxu0 %v888
  %1106 = vmatpush.msra.mxu0 %v884
  %1107 = vmatpush.msra.mxu0 %v880
  %1108 = vmatpush.msra.mxu0 %v876
  %1109 = vmatmul.f32.gmra.mxu0 %v803
  %v1110 = vpop.f32.mrf.mxu0
  %v1111 = vadd.f32 %v1082, %v1110
  %1112 = vmatmul.f32.gmra.mxu0 %v805
  %v1113 = vpop.f32.mrf.mxu0
  %v1114 = vadd.f32 %v1085, %v1113
  %1115 = vmatmul.f32.gmra.mxu0 %v807
  %v1116 = vpop.f32.mrf.mxu0
  %v1117 = vadd.f32 %v1088, %v1116
  %1118 = vmatmul.f32.gmra.mxu0 %v809
  %v1119 = vpop.f32.mrf.mxu0
  %v1120 = vadd.f32 %v1091, %v1119
  %1121 = vdwg.mxu0
  %1122 = vmatpush.msra.mxu0 %v873
  %1123 = vmatpush.msra.mxu0 %v869
  %1124 = vmatpush.msra.mxu0 %v865
  %1125 = vmatpush.msra.mxu0 %v861
  %1126 = vmatpush.msra.mxu0 %v857
  %1127 = vmatpush.msra.mxu0 %v853
  %1128 = vmatpush.msra.mxu0 %v849
  %1129 = vmatpush.msra.mxu0 %v845
  %1130 = vmatpush.msra.mxu0 %v841
  %1131 = vmatpush.msra.mxu0 %v837
  %1132 = vmatpush.msra.mxu0 %v833
  %1133 = vmatpush.msra.mxu0 %v829
  %1134 = vmatpush.msra.mxu0 %v825
  %1135 = vmatpush.msra.mxu0 %v821
  %1136 = vmatpush.msra.mxu0 %v817
  %1137 = vmatpush.msra.mxu0 %v813
  %1138 = vmatmul.f32.gmra.mxu0 %v802
  %v1139 = vpop.f32.mrf.mxu0
  %v1140 = vadd.f32 %v943, %v1139
  %1141 = vmatmul.f32.gmra.mxu0 %v804
  %v1142 = vpop.f32.mrf.mxu0
  %v1143 = vadd.f32 %v943, %v1142
  %1144 = vmatmul.f32.gmra.mxu0 %v806
  %v1145 = vpop.f32.mrf.mxu0
  %v1146 = vadd.f32 %v943, %v1145
  %1147 = vmatmul.f32.gmra.mxu0 %v808
  %v1148 = vpop.f32.mrf.mxu0
  %v1149 = vadd.f32 %v943, %v1148
  %1150 = vdwg.mxu0
  %1151 = vmatpush.msra.mxu0 %v937
  %1152 = vmatpush.msra.mxu0 %v933
  %1153 = vmatpush.msra.mxu0 %v929
  %1154 = vmatpush.msra.mxu0 %v925
  %1155 = vmatpush.msra.mxu0 %v921
  %1156 = vmatpush.msra.mxu0 %v917
  %1157 = vmatpush.msra.mxu0 %v913
  %1158 = vmatpush.msra.mxu0 %v909
  %1159 = vmatpush.msra.mxu0 %v905
  %1160 = vmatpush.msra.mxu0 %v901
  %1161 = vmatpush.msra.mxu0 %v897
  %1162 = vmatpush.msra.mxu0 %v893
  %1163 = vmatpush.msra.mxu0 %v889
  %1164 = vmatpush.msra.mxu0 %v885
  %1165 = vmatpush.msra.mxu0 %v881
  %1166 = vmatpush.msra.mxu0 %v877
  %1167 = vmatmul.f32.gmra.mxu0 %v803
  %v1168 = vpop.f32.mrf.mxu0
  %v1169 = vadd.f32 %v1140, %v1168
  %1170 = vmatmul.f32.gmra.mxu0 %v805
  %v1171 = vpop.f32.mrf.mxu0
  %v1172 = vadd.f32 %v1143, %v1171
  %1173 = vmatmul.f32.gmra.mxu0 %v807
  %v1174 = vpop.f32.mrf.mxu0
  %v1175 = vadd.f32 %v1146, %v1174
  %1176 = vmatmul.f32.gmra.mxu0 %v809
  %v1177 = vpop.f32.mrf.mxu0
  %v1178 = vadd.f32 %v1149, %v1177
  %1179 = vdwg.mxu0
  %1180 = vst [vmem:[%s3 + $0x40] sm:$0xff] %v995
  %1181 = vst [vmem:[%s3 + $0x48] sm:$0xff] %v1053
  %1182 = vst [vmem:[%s3 + $0x50] sm:$0xff] %v1111
  %1183 = vst [vmem:[%s3 + $0x58] sm:$0xff] %v1169
  %1184 = vst [vmem:[%s3 + $0x100] sm:$0xff] %v998
  %1185 = vst [vmem:[%s3 + $0x108] sm:$0xff] %v1056
  %1186 = vst [vmem:[%s3 + $0x110] sm:$0xff] %v1114
  %1187 = vst [vmem:[%s3 + $0x118] sm:$0xff] %v1172
  %1188 = vst [vmem:[%s3 + $0x1c0] sm:$0xff] %v1001
  %1189 = vst [vmem:[%s3 + $0x1c8] sm:$0xff] %v1059
  %1190 = vst [vmem:[%s3 + $0x1d0] sm:$0xff] %v1117
  %1191 = vst [vmem:[%s3 + $0x1d8] sm:$0xff] %v1175
  %1192 = vst [vmem:[%s3 + $0x280] sm:$0xff] %v1004
  %1193 = vst [vmem:[%s3 + $0x288] sm:$0xff] %v1062
  %1194 = vst [vmem:[%s3 + $0x290] sm:$0xff] %v1120
  %1195 = vst [vmem:[%s3 + $0x298] sm:$0xff] %v1178
  %v1196 = vld [vmem:[%s0 + $0x30] sm:$0xff]
  %v1197 = vld [vmem:[%s0 + $0x38] sm:$0xff]
  %v1198 = vld [vmem:[%s0 + $0x90] sm:$0xff]
  %v1199 = vld [vmem:[%s0 + $0x98] sm:$0xff]
  %v1200 = vld [vmem:[%s0 + $0xf0] sm:$0xff]
  %v1201 = vld [vmem:[%s0 + $0xf8] sm:$0xff]
  %v1202 = vld [vmem:[%s0 + $0x150] sm:$0xff]
  %v1203 = vld [vmem:[%s0 + $0x158] sm:$0xff]
  %v1204 = vld [vmem:[%s1] sm:$0xff]
  %v1205 = vld [vmem:[%s1 + $0x8] sm:$0xff]
  %v1206 = vld [vmem:[%s1 + $0x10] sm:$0xff]
  %v1207 = vld [vmem:[%s1 + $0x18] sm:$0xff]
  %v1208 = vld [vmem:[%s1 + $0x20] sm:$0xff]
  %v1209 = vld [vmem:[%s1 + $0x28] sm:$0xff]
  %v1210 = vld [vmem:[%s1 + $0x30] sm:$0xff]
  %v1211 = vld [vmem:[%s1 + $0x38] sm:$0xff]
  %v1212 = vld [vmem:[%s1 + $0x40] sm:$0xff]
  %v1213 = vld [vmem:[%s1 + $0x48] sm:$0xff]
  %v1214 = vld [vmem:[%s1 + $0x50] sm:$0xff]
  %v1215 = vld [vmem:[%s1 + $0x58] sm:$0xff]
  %v1216 = vld [vmem:[%s1 + $0x60] sm:$0xff]
  %v1217 = vld [vmem:[%s1 + $0x68] sm:$0xff]
  %v1218 = vld [vmem:[%s1 + $0x70] sm:$0xff]
  %v1219 = vld [vmem:[%s1 + $0x78] sm:$0xff]
  %v1220 = vld [vmem:[%s1 + $0x80] sm:$0xff]
  %v1221 = vld [vmem:[%s1 + $0x88] sm:$0xff]
  %v1222 = vld [vmem:[%s1 + $0x90] sm:$0xff]
  %v1223 = vld [vmem:[%s1 + $0x98] sm:$0xff]
  %v1224 = vld [vmem:[%s1 + $0xa0] sm:$0xff]
  %v1225 = vld [vmem:[%s1 + $0xa8] sm:$0xff]
  %v1226 = vld [vmem:[%s1 + $0xb0] sm:$0xff]
  %v1227 = vld [vmem:[%s1 + $0xb8] sm:$0xff]
  %v1228 = vld [vmem:[%s1 + $0xc0] sm:$0xff]
  %v1229 = vld [vmem:[%s1 + $0xc8] sm:$0xff]
  %v1230 = vld [vmem:[%s1 + $0xd0] sm:$0xff]
  %v1231 = vld [vmem:[%s1 + $0xd8] sm:$0xff]
  %v1232 = vld [vmem:[%s1 + $0xe0] sm:$0xff]
  %v1233 = vld [vmem:[%s1 + $0xe8] sm:$0xff]
  %v1234 = vld [vmem:[%s1 + $0xf0] sm:$0xff]
  %v1235 = vld [vmem:[%s1 + $0xf8] sm:$0xff]
  %v1236 = vld [vmem:[%s1 + $0x100] sm:$0xff]
  %v1237 = vld [vmem:[%s1 + $0x108] sm:$0xff]
  %v1238 = vld [vmem:[%s1 + $0x110] sm:$0xff]
  %v1239 = vld [vmem:[%s1 + $0x118] sm:$0xff]
  %v1240 = vld [vmem:[%s1 + $0x120] sm:$0xff]
  %v1241 = vld [vmem:[%s1 + $0x128] sm:$0xff]
  %v1242 = vld [vmem:[%s1 + $0x130] sm:$0xff]
  %v1243 = vld [vmem:[%s1 + $0x138] sm:$0xff]
  %v1244 = vld [vmem:[%s1 + $0x140] sm:$0xff]
  %v1245 = vld [vmem:[%s1 + $0x148] sm:$0xff]
  %v1246 = vld [vmem:[%s1 + $0x150] sm:$0xff]
  %v1247 = vld [vmem:[%s1 + $0x158] sm:$0xff]
  %v1248 = vld [vmem:[%s1 + $0x160] sm:$0xff]
  %v1249 = vld [vmem:[%s1 + $0x168] sm:$0xff]
  %v1250 = vld [vmem:[%s1 + $0x170] sm:$0xff]
  %v1251 = vld [vmem:[%s1 + $0x178] sm:$0xff]
  %v1252 = vld [vmem:[%s1 + $0x180] sm:$0xff]
  %v1253 = vld [vmem:[%s1 + $0x188] sm:$0xff]
  %v1254 = vld [vmem:[%s1 + $0x190] sm:$0xff]
  %v1255 = vld [vmem:[%s1 + $0x198] sm:$0xff]
  %v1256 = vld [vmem:[%s1 + $0x1a0] sm:$0xff]
  %v1257 = vld [vmem:[%s1 + $0x1a8] sm:$0xff]
  %v1258 = vld [vmem:[%s1 + $0x1b0] sm:$0xff]
  %v1259 = vld [vmem:[%s1 + $0x1b8] sm:$0xff]
  %v1260 = vld [vmem:[%s1 + $0x1c0] sm:$0xff]
  %v1261 = vld [vmem:[%s1 + $0x1c8] sm:$0xff]
  %v1262 = vld [vmem:[%s1 + $0x1d0] sm:$0xff]
  %v1263 = vld [vmem:[%s1 + $0x1d8] sm:$0xff]
  %v1264 = vld [vmem:[%s1 + $0x1e0] sm:$0xff]
  %v1265 = vld [vmem:[%s1 + $0x1e8] sm:$0xff]
  %v1266 = vld [vmem:[%s1 + $0x1f0] sm:$0xff]
  %v1267 = vld [vmem:[%s1 + $0x1f8] sm:$0xff]
  %v1268 = vld [vmem:[%s1 + $0x200] sm:$0xff]
  %v1269 = vld [vmem:[%s1 + $0x208] sm:$0xff]
  %v1270 = vld [vmem:[%s1 + $0x210] sm:$0xff]
  %v1271 = vld [vmem:[%s1 + $0x218] sm:$0xff]
  %v1272 = vld [vmem:[%s1 + $0x220] sm:$0xff]
  %v1273 = vld [vmem:[%s1 + $0x228] sm:$0xff]
  %v1274 = vld [vmem:[%s1 + $0x230] sm:$0xff]
  %v1275 = vld [vmem:[%s1 + $0x238] sm:$0xff]
  %v1276 = vld [vmem:[%s1 + $0x240] sm:$0xff]
  %v1277 = vld [vmem:[%s1 + $0x248] sm:$0xff]
  %v1278 = vld [vmem:[%s1 + $0x250] sm:$0xff]
  %v1279 = vld [vmem:[%s1 + $0x258] sm:$0xff]
  %v1280 = vld [vmem:[%s1 + $0x260] sm:$0xff]
  %v1281 = vld [vmem:[%s1 + $0x268] sm:$0xff]
  %v1282 = vld [vmem:[%s1 + $0x270] sm:$0xff]
  %v1283 = vld [vmem:[%s1 + $0x278] sm:$0xff]
  %v1284 = vld [vmem:[%s1 + $0x280] sm:$0xff]
  %v1285 = vld [vmem:[%s1 + $0x288] sm:$0xff]
  %v1286 = vld [vmem:[%s1 + $0x290] sm:$0xff]
  %v1287 = vld [vmem:[%s1 + $0x298] sm:$0xff]
  %v1288 = vld [vmem:[%s1 + $0x2a0] sm:$0xff]
  %v1289 = vld [vmem:[%s1 + $0x2a8] sm:$0xff]
  %v1290 = vld [vmem:[%s1 + $0x2b0] sm:$0xff]
  %v1291 = vld [vmem:[%s1 + $0x2b8] sm:$0xff]
  %v1292 = vld [vmem:[%s1 + $0x2c0] sm:$0xff]
  %v1293 = vld [vmem:[%s1 + $0x2c8] sm:$0xff]
  %v1294 = vld [vmem:[%s1 + $0x2d0] sm:$0xff]
  %v1295 = vld [vmem:[%s1 + $0x2d8] sm:$0xff]
  %v1296 = vld [vmem:[%s1 + $0x2e0] sm:$0xff]
  %v1297 = vld [vmem:[%s1 + $0x2e8] sm:$0xff]
  %v1298 = vld [vmem:[%s1 + $0x2f0] sm:$0xff]
  %v1299 = vld [vmem:[%s1 + $0x2f8] sm:$0xff]
  %v1300 = vld [vmem:[%s1 + $0x300] sm:$0xff]
  %v1301 = vld [vmem:[%s1 + $0x308] sm:$0xff]
  %v1302 = vld [vmem:[%s1 + $0x310] sm:$0xff]
  %v1303 = vld [vmem:[%s1 + $0x318] sm:$0xff]
  %v1304 = vld [vmem:[%s1 + $0x320] sm:$0xff]
  %v1305 = vld [vmem:[%s1 + $0x328] sm:$0xff]
  %v1306 = vld [vmem:[%s1 + $0x330] sm:$0xff]
  %v1307 = vld [vmem:[%s1 + $0x338] sm:$0xff]
  %v1308 = vld [vmem:[%s1 + $0x340] sm:$0xff]
  %v1309 = vld [vmem:[%s1 + $0x348] sm:$0xff]
  %v1310 = vld [vmem:[%s1 + $0x350] sm:$0xff]
  %v1311 = vld [vmem:[%s1 + $0x358] sm:$0xff]
  %v1312 = vld [vmem:[%s1 + $0x360] sm:$0xff]
  %v1313 = vld [vmem:[%s1 + $0x368] sm:$0xff]
  %v1314 = vld [vmem:[%s1 + $0x370] sm:$0xff]
  %v1315 = vld [vmem:[%s1 + $0x378] sm:$0xff]
  %v1316 = vld [vmem:[%s1 + $0x380] sm:$0xff]
  %v1317 = vld [vmem:[%s1 + $0x388] sm:$0xff]
  %v1318 = vld [vmem:[%s1 + $0x390] sm:$0xff]
  %v1319 = vld [vmem:[%s1 + $0x398] sm:$0xff]
  %v1320 = vld [vmem:[%s1 + $0x3a0] sm:$0xff]
  %v1321 = vld [vmem:[%s1 + $0x3a8] sm:$0xff]
  %v1322 = vld [vmem:[%s1 + $0x3b0] sm:$0xff]
  %v1323 = vld [vmem:[%s1 + $0x3b8] sm:$0xff]
  %v1324 = vld [vmem:[%s1 + $0x3c0] sm:$0xff]
  %v1325 = vld [vmem:[%s1 + $0x3c8] sm:$0xff]
  %v1326 = vld [vmem:[%s1 + $0x3d0] sm:$0xff]
  %v1327 = vld [vmem:[%s1 + $0x3d8] sm:$0xff]
  %v1328 = vld [vmem:[%s1 + $0x3e0] sm:$0xff]
  %v1329 = vld [vmem:[%s1 + $0x3e8] sm:$0xff]
  %v1330 = vld [vmem:[%s1 + $0x3f0] sm:$0xff]
  %v1331 = vld [vmem:[%s1 + $0x3f8] sm:$0xff]
  %v1332 = vld [vmem:[%s2] sm:$0xf]
  %v1334 = vperm.slane %v1332, 0
  %v1335 = vperm.slane %v1332, 1
  %v1336 = vperm.slane %v1332, 2
  %v1337 = vperm.slane %v1332, 3
  %1342 = vmatpush.msra.mxu0 %v1264
  %1343 = vmatpush.msra.mxu0 %v1260
  %1344 = vmatpush.msra.mxu0 %v1256
  %1345 = vmatpush.msra.mxu0 %v1252
  %1346 = vmatpush.msra.mxu0 %v1248
  %1347 = vmatpush.msra.mxu0 %v1244
  %1348 = vmatpush.msra.mxu0 %v1240
  %1349 = vmatpush.msra.mxu0 %v1236
  %1350 = vmatpush.msra.mxu0 %v1232
  %1351 = vmatpush.msra.mxu0 %v1228
  %1352 = vmatpush.msra.mxu0 %v1224
  %1353 = vmatpush.msra.mxu0 %v1220
  %1354 = vmatpush.msra.mxu0 %v1216
  %1355 = vmatpush.msra.mxu0 %v1212
  %1356 = vmatpush.msra.mxu0 %v1208
  %1357 = vmatpush.msra.mxu0 %v1204
  %1358 = vmatmul.f32.gmra.mxu0 %v1196
  %v1359 = vpop.f32.mrf.mxu0
  %v1360 = vadd.f32 %v1334, %v1359
  %1361 = vmatmul.f32.gmra.mxu0 %v1198
  %v1362 = vpop.f32.mrf.mxu0
  %v1363 = vadd.f32 %v1334, %v1362
  %1364 = vmatmul.f32.gmra.mxu0 %v1200
  %v1365 = vpop.f32.mrf.mxu0
  %v1366 = vadd.f32 %v1334, %v1365
  %1367 = vmatmul.f32.gmra.mxu0 %v1202
  %v1368 = vpop.f32.mrf.mxu0
  %v1369 = vadd.f32 %v1334, %v1368
  %1370 = vdwg.mxu0
  %1371 = vmatpush.msra.mxu0 %v1328
  %1372 = vmatpush.msra.mxu0 %v1324
  %1373 = vmatpush.msra.mxu0 %v1320
  %1374 = vmatpush.msra.mxu0 %v1316
  %1375 = vmatpush.msra.mxu0 %v1312
  %1376 = vmatpush.msra.mxu0 %v1308
  %1377 = vmatpush.msra.mxu0 %v1304
  %1378 = vmatpush.msra.mxu0 %v1300
  %1379 = vmatpush.msra.mxu0 %v1296
  %1380 = vmatpush.msra.mxu0 %v1292
  %1381 = vmatpush.msra.mxu0 %v1288
  %1382 = vmatpush.msra.mxu0 %v1284
  %1383 = vmatpush.msra.mxu0 %v1280
  %1384 = vmatpush.msra.mxu0 %v1276
  %1385 = vmatpush.msra.mxu0 %v1272
  %1386 = vmatpush.msra.mxu0 %v1268
  %1387 = vmatmul.f32.gmra.mxu0 %v1197
  %v1388 = vpop.f32.mrf.mxu0
  %v1389 = vadd.f32 %v1360, %v1388
  %1390 = vmatmul.f32.gmra.mxu0 %v1199
  %v1391 = vpop.f32.mrf.mxu0
  %v1392 = vadd.f32 %v1363, %v1391
  %1393 = vmatmul.f32.gmra.mxu0 %v1201
  %v1394 = vpop.f32.mrf.mxu0
  %v1395 = vadd.f32 %v1366, %v1394
  %1396 = vmatmul.f32.gmra.mxu0 %v1203
  %v1397 = vpop.f32.mrf.mxu0
  %v1398 = vadd.f32 %v1369, %v1397
  %1399 = vdwg.mxu0
  %1400 = vmatpush.msra.mxu0 %v1265
  %1401 = vmatpush.msra.mxu0 %v1261
  %1402 = vmatpush.msra.mxu0 %v1257
  %1403 = vmatpush.msra.mxu0 %v1253
  %1404 = vmatpush.msra.mxu0 %v1249
  %1405 = vmatpush.msra.mxu0 %v1245
  %1406 = vmatpush.msra.mxu0 %v1241
  %1407 = vmatpush.msra.mxu0 %v1237
  %1408 = vmatpush.msra.mxu0 %v1233
  %1409 = vmatpush.msra.mxu0 %v1229
  %1410 = vmatpush.msra.mxu0 %v1225
  %1411 = vmatpush.msra.mxu0 %v1221
  %1412 = vmatpush.msra.mxu0 %v1217
  %1413 = vmatpush.msra.mxu0 %v1213
  %1414 = vmatpush.msra.mxu0 %v1209
  %1415 = vmatpush.msra.mxu0 %v1205
  %1416 = vmatmul.f32.gmra.mxu0 %v1196
  %v1417 = vpop.f32.mrf.mxu0
  %v1418 = vadd.f32 %v1335, %v1417
  %1419 = vmatmul.f32.gmra.mxu0 %v1198
  %v1420 = vpop.f32.mrf.mxu0
  %v1421 = vadd.f32 %v1335, %v1420
  %1422 = vmatmul.f32.gmra.mxu0 %v1200
  %v1423 = vpop.f32.mrf.mxu0
  %v1424 = vadd.f32 %v1335, %v1423
  %1425 = vmatmul.f32.gmra.mxu0 %v1202
  %v1426 = vpop.f32.mrf.mxu0
  %v1427 = vadd.f32 %v1335, %v1426
  %1428 = vdwg.mxu0
  %1429 = vmatpush.msra.mxu0 %v1329
  %1430 = vmatpush.msra.mxu0 %v1325
  %1431 = vmatpush.msra.mxu0 %v1321
  %1432 = vmatpush.msra.mxu0 %v1317
  %1433 = vmatpush.msra.mxu0 %v1313
  %1434 = vmatpush.msra.mxu0 %v1309
  %1435 = vmatpush.msra.mxu0 %v1305
  %1436 = vmatpush.msra.mxu0 %v1301
  %1437 = vmatpush.msra.mxu0 %v1297
  %1438 = vmatpush.msra.mxu0 %v1293
  %1439 = vmatpush.msra.mxu0 %v1289
  %1440 = vmatpush.msra.mxu0 %v1285
  %1441 = vmatpush.msra.mxu0 %v1281
  %1442 = vmatpush.msra.mxu0 %v1277
  %1443 = vmatpush.msra.mxu0 %v1273
  %1444 = vmatpush.msra.mxu0 %v1269
  %1445 = vmatmul.f32.gmra.mxu0 %v1197
  %v1446 = vpop.f32.mrf.mxu0
  %v1447 = vadd.f32 %v1418, %v1446
  %1448 = vmatmul.f32.gmra.mxu0 %v1199
  %v1449 = vpop.f32.mrf.mxu0
  %v1450 = vadd.f32 %v1421, %v1449
  %1451 = vmatmul.f32.gmra.mxu0 %v1201
  %v1452 = vpop.f32.mrf.mxu0
  %v1453 = vadd.f32 %v1424, %v1452
  %1454 = vmatmul.f32.gmra.mxu0 %v1203
  %v1455 = vpop.f32.mrf.mxu0
  %v1456 = vadd.f32 %v1427, %v1455
  %1457 = vdwg.mxu0
  %1458 = vmatpush.msra.mxu0 %v1266
  %1459 = vmatpush.msra.mxu0 %v1262
  %1460 = vmatpush.msra.mxu0 %v1258
  %1461 = vmatpush.msra.mxu0 %v1254
  %1462 = vmatpush.msra.mxu0 %v1250
  %1463 = vmatpush.msra.mxu0 %v1246
  %1464 = vmatpush.msra.mxu0 %v1242
  %1465 = vmatpush.msra.mxu0 %v1238
  %1466 = vmatpush.msra.mxu0 %v1234
  %1467 = vmatpush.msra.mxu0 %v1230
  %1468 = vmatpush.msra.mxu0 %v1226
  %1469 = vmatpush.msra.mxu0 %v1222
  %1470 = vmatpush.msra.mxu0 %v1218
  %1471 = vmatpush.msra.mxu0 %v1214
  %1472 = vmatpush.msra.mxu0 %v1210
  %1473 = vmatpush.msra.mxu0 %v1206
  %1474 = vmatmul.f32.gmra.mxu0 %v1196
  %v1475 = vpop.f32.mrf.mxu0
  %v1476 = vadd.f32 %v1336, %v1475
  %1477 = vmatmul.f32.gmra.mxu0 %v1198
  %v1478 = vpop.f32.mrf.mxu0
  %v1479 = vadd.f32 %v1336, %v1478
  %1480 = vmatmul.f32.gmra.mxu0 %v1200
  %v1481 = vpop.f32.mrf.mxu0
  %v1482 = vadd.f32 %v1336, %v1481
  %1483 = vmatmul.f32.gmra.mxu0 %v1202
  %v1484 = vpop.f32.mrf.mxu0
  %v1485 = vadd.f32 %v1336, %v1484
  %1486 = vdwg.mxu0
  %1487 = vmatpush.msra.mxu0 %v1330
  %1488 = vmatpush.msra.mxu0 %v1326
  %1489 = vmatpush.msra.mxu0 %v1322
  %1490 = vmatpush.msra.mxu0 %v1318
  %1491 = vmatpush.msra.mxu0 %v1314
  %1492 = vmatpush.msra.mxu0 %v1310
  %1493 = vmatpush.msra.mxu0 %v1306
  %1494 = vmatpush.msra.mxu0 %v1302
  %1495 = vmatpush.msra.mxu0 %v1298
  %1496 = vmatpush.msra.mxu0 %v1294
  %1497 = vmatpush.msra.mxu0 %v1290
  %1498 = vmatpush.msra.mxu0 %v1286
  %1499 = vmatpush.msra.mxu0 %v1282
  %1500 = vmatpush.msra.mxu0 %v1278
  %1501 = vmatpush.msra.mxu0 %v1274
  %1502 = vmatpush.msra.mxu0 %v1270
  %1503 = vmatmul.f32.gmra.mxu0 %v1197
  %v1504 = vpop.f32.mrf.mxu0
  %v1505 = vadd.f32 %v1476, %v1504
  %1506 = vmatmul.f32.gmra.mxu0 %v1199
  %v1507 = vpop.f32.mrf.mxu0
  %v1508 = vadd.f32 %v1479, %v1507
  %1509 = vmatmul.f32.gmra.mxu0 %v1201
  %v1510 = vpop.f32.mrf.mxu0
  %v1511 = vadd.f32 %v1482, %v1510
  %1512 = vmatmul.f32.gmra.mxu0 %v1203
  %v1513 = vpop.f32.mrf.mxu0
  %v1514 = vadd.f32 %v1485, %v1513
  %1515 = vdwg.mxu0
  %1516 = vmatpush.msra.mxu0 %v1267
  %1517 = vmatpush.msra.mxu0 %v1263
  %1518 = vmatpush.msra.mxu0 %v1259
  %1519 = vmatpush.msra.mxu0 %v1255
  %1520 = vmatpush.msra.mxu0 %v1251
  %1521 = vmatpush.msra.mxu0 %v1247
  %1522 = vmatpush.msra.mxu0 %v1243
  %1523 = vmatpush.msra.mxu0 %v1239
  %1524 = vmatpush.msra.mxu0 %v1235
  %1525 = vmatpush.msra.mxu0 %v1231
  %1526 = vmatpush.msra.mxu0 %v1227
  %1527 = vmatpush.msra.mxu0 %v1223
  %1528 = vmatpush.msra.mxu0 %v1219
  %1529 = vmatpush.msra.mxu0 %v1215
  %1530 = vmatpush.msra.mxu0 %v1211
  %1531 = vmatpush.msra.mxu0 %v1207
  %1532 = vmatmul.f32.gmra.mxu0 %v1196
  %v1533 = vpop.f32.mrf.mxu0
  %v1534 = vadd.f32 %v1337, %v1533
  %1535 = vmatmul.f32.gmra.mxu0 %v1198
  %v1536 = vpop.f32.mrf.mxu0
  %v1537 = vadd.f32 %v1337, %v1536
  %1538 = vmatmul.f32.gmra.mxu0 %v1200
  %v1539 = vpop.f32.mrf.mxu0
  %v1540 = vadd.f32 %v1337, %v1539
  %1541 = vmatmul.f32.gmra.mxu0 %v1202
  %v1542 = vpop.f32.mrf.mxu0
  %v1543 = vadd.f32 %v1337, %v1542
  %1544 = vdwg.mxu0
  %1545 = vmatpush.msra.mxu0 %v1331
  %1546 = vmatpush.msra.mxu0 %v1327
  %1547 = vmatpush.msra.mxu0 %v1323
  %1548 = vmatpush.msra.mxu0 %v1319
  %1549 = vmatpush.msra.mxu0 %v1315
  %1550 = vmatpush.msra.mxu0 %v1311
  %1551 = vmatpush.msra.mxu0 %v1307
  %1552 = vmatpush.msra.mxu0 %v1303
  %1553 = vmatpush.msra.mxu0 %v1299
  %1554 = vmatpush.msra.mxu0 %v1295
  %1555 = vmatpush.msra.mxu0 %v1291
  %1556 = vmatpush.msra.mxu0 %v1287
  %1557 = vmatpush.msra.mxu0 %v1283
  %1558 = vmatpush.msra.mxu0 %v1279
  %1559 = vmatpush.msra.mxu0 %v1275
  %1560 = vmatpush.msra.mxu0 %v1271
  %1561 = vmatmul.f32.gmra.mxu0 %v1197
  %v1562 = vpop.f32.mrf.mxu0
  %v1563 = vadd.f32 %v1534, %v1562
  %1564 = vmatmul.f32.gmra.mxu0 %v1199
  %v1565 = vpop.f32.mrf.mxu0
  %v1566 = vadd.f32 %v1537, %v1565
  %1567 = vmatmul.f32.gmra.mxu0 %v1201
  %v1568 = vpop.f32.mrf.mxu0
  %v1569 = vadd.f32 %v1540, %v1568
  %1570 = vmatmul.f32.gmra.mxu0 %v1203
  %v1571 = vpop.f32.mrf.mxu0
  %v1572 = vadd.f32 %v1543, %v1571
  %1573 = vdwg.mxu0
  %1574 = vst [vmem:[%s3 + $0x60] sm:$0xff] %v1389
  %1575 = vst [vmem:[%s3 + $0x68] sm:$0xff] %v1447
  %1576 = vst [vmem:[%s3 + $0x70] sm:$0xff] %v1505
  %1577 = vst [vmem:[%s3 + $0x78] sm:$0xff] %v1563
  %1578 = vst [vmem:[%s3 + $0x120] sm:$0xff] %v1392
  %1579 = vst [vmem:[%s3 + $0x128] sm:$0xff] %v1450
  %1580 = vst [vmem:[%s3 + $0x130] sm:$0xff] %v1508
  %1581 = vst [vmem:[%s3 + $0x138] sm:$0xff] %v1566
  %1582 = vst [vmem:[%s3 + $0x1e0] sm:$0xff] %v1395
  %1583 = vst [vmem:[%s3 + $0x1e8] sm:$0xff] %v1453
  %1584 = vst [vmem:[%s3 + $0x1f0] sm:$0xff] %v1511
  %1585 = vst [vmem:[%s3 + $0x1f8] sm:$0xff] %v1569
  %1586 = vst [vmem:[%s3 + $0x2a0] sm:$0xff] %v1398
  %1587 = vst [vmem:[%s3 + $0x2a8] sm:$0xff] %v1456
  %1588 = vst [vmem:[%s3 + $0x2b0] sm:$0xff] %v1514
  %1589 = vst [vmem:[%s3 + $0x2b8] sm:$0xff] %v1572
  %v1590 = vld [vmem:[%s0 + $0x40] sm:$0xff]
  %v1591 = vld [vmem:[%s0 + $0x48] sm:$0xff]
  %v1592 = vld [vmem:[%s0 + $0xa0] sm:$0xff]
  %v1593 = vld [vmem:[%s0 + $0xa8] sm:$0xff]
  %v1594 = vld [vmem:[%s0 + $0x100] sm:$0xff]
  %v1595 = vld [vmem:[%s0 + $0x108] sm:$0xff]
  %v1596 = vld [vmem:[%s0 + $0x160] sm:$0xff]
  %v1597 = vld [vmem:[%s0 + $0x168] sm:$0xff]
  %v1598 = vld [vmem:[%s1] sm:$0xff]
  %v1599 = vld [vmem:[%s1 + $0x8] sm:$0xff]
  %v1600 = vld [vmem:[%s1 + $0x10] sm:$0xff]
  %v1601 = vld [vmem:[%s1 + $0x18] sm:$0xff]
  %v1602 = vld [vmem:[%s1 + $0x20] sm:$0xff]
  %v1603 = vld [vmem:[%s1 + $0x28] sm:$0xff]
  %v1604 = vld [vmem:[%s1 + $0x30] sm:$0xff]
  %v1605 = vld [vmem:[%s1 + $0x38] sm:$0xff]
  %v1606 = vld [vmem:[%s1 + $0x40] sm:$0xff]
  %v1607 = vld [vmem:[%s1 + $0x48] sm:$0xff]
  %v1608 = vld [vmem:[%s1 + $0x50] sm:$0xff]
  %v1609 = vld [vmem:[%s1 + $0x58] sm:$0xff]
  %v1610 = vld [vmem:[%s1 + $0x60] sm:$0xff]
  %v1611 = vld [vmem:[%s1 + $0x68] sm:$0xff]
  %v1612 = vld [vmem:[%s1 + $0x70] sm:$0xff]
  %v1613 = vld [vmem:[%s1 + $0x78] sm:$0xff]
  %v1614 = vld [vmem:[%s1 + $0x80] sm:$0xff]
  %v1615 = vld [vmem:[%s1 + $0x88] sm:$0xff]
  %v1616 = vld [vmem:[%s1 + $0x90] sm:$0xff]
  %v1617 = vld [vmem:[%s1 + $0x98] sm:$0xff]
  %v1618 = vld [vmem:[%s1 + $0xa0] sm:$0xff]
  %v1619 = vld [vmem:[%s1 + $0xa8] sm:$0xff]
  %v1620 = vld [vmem:[%s1 + $0xb0] sm:$0xff]
  %v1621 = vld [vmem:[%s1 + $0xb8] sm:$0xff]
  %v1622 = vld [vmem:[%s1 + $0xc0] sm:$0xff]
  %v1623 = vld [vmem:[%s1 + $0xc8] sm:$0xff]
  %v1624 = vld [vmem:[%s1 + $0xd0] sm:$0xff]
  %v1625 = vld [vmem:[%s1 + $0xd8] sm:$0xff]
  %v1626 = vld [vmem:[%s1 + $0xe0] sm:$0xff]
  %v1627 = vld [vmem:[%s1 + $0xe8] sm:$0xff]
  %v1628 = vld [vmem:[%s1 + $0xf0] sm:$0xff]
  %v1629 = vld [vmem:[%s1 + $0xf8] sm:$0xff]
  %v1630 = vld [vmem:[%s1 + $0x100] sm:$0xff]
  %v1631 = vld [vmem:[%s1 + $0x108] sm:$0xff]
  %v1632 = vld [vmem:[%s1 + $0x110] sm:$0xff]
  %v1633 = vld [vmem:[%s1 + $0x118] sm:$0xff]
  %v1634 = vld [vmem:[%s1 + $0x120] sm:$0xff]
  %v1635 = vld [vmem:[%s1 + $0x128] sm:$0xff]
  %v1636 = vld [vmem:[%s1 + $0x130] sm:$0xff]
  %v1637 = vld [vmem:[%s1 + $0x138] sm:$0xff]
  %v1638 = vld [vmem:[%s1 + $0x140] sm:$0xff]
  %v1639 = vld [vmem:[%s1 + $0x148] sm:$0xff]
  %v1640 = vld [vmem:[%s1 + $0x150] sm:$0xff]
  %v1641 = vld [vmem:[%s1 + $0x158] sm:$0xff]
  %v1642 = vld [vmem:[%s1 + $0x160] sm:$0xff]
  %v1643 = vld [vmem:[%s1 + $0x168] sm:$0xff]
  %v1644 = vld [vmem:[%s1 + $0x170] sm:$0xff]
  %v1645 = vld [vmem:[%s1 + $0x178] sm:$0xff]
  %v1646 = vld [vmem:[%s1 + $0x180] sm:$0xff]
  %v1647 = vld [vmem:[%s1 + $0x188] sm:$0xff]
  %v1648 = vld [vmem:[%s1 + $0x190] sm:$0xff]
  %v1649 = vld [vmem:[%s1 + $0x198] sm:$0xff]
  %v1650 = vld [vmem:[%s1 + $0x1a0] sm:$0xff]
  %v1651 = vld [vmem:[%s1 + $0x1a8] sm:$0xff]
  %v1652 = vld [vmem:[%s1 + $0x1b0] sm:$0xff]
  %v1653 = vld [vmem:[%s1 + $0x1b8] sm:$0xff]
  %v1654 = vld [vmem:[%s1 + $0x1c0] sm:$0xff]
  %v1655 = vld [vmem:[%s1 + $0x1c8] sm:$0xff]
  %v1656 = vld [vmem:[%s1 + $0x1d0] sm:$0xff]
  %v1657 = vld [vmem:[%s1 + $0x1d8] sm:$0xff]
  %v1658 = vld [vmem:[%s1 + $0x1e0] sm:$0xff]
  %v1659 = vld [vmem:[%s1 + $0x1e8] sm:$0xff]
  %v1660 = vld [vmem:[%s1 + $0x1f0] sm:$0xff]
  %v1661 = vld [vmem:[%s1 + $0x1f8] sm:$0xff]
  %v1662 = vld [vmem:[%s1 + $0x200] sm:$0xff]
  %v1663 = vld [vmem:[%s1 + $0x208] sm:$0xff]
  %v1664 = vld [vmem:[%s1 + $0x210] sm:$0xff]
  %v1665 = vld [vmem:[%s1 + $0x218] sm:$0xff]
  %v1666 = vld [vmem:[%s1 + $0x220] sm:$0xff]
  %v1667 = vld [vmem:[%s1 + $0x228] sm:$0xff]
  %v1668 = vld [vmem:[%s1 + $0x230] sm:$0xff]
  %v1669 = vld [vmem:[%s1 + $0x238] sm:$0xff]
  %v1670 = vld [vmem:[%s1 + $0x240] sm:$0xff]
  %v1671 = vld [vmem:[%s1 + $0x248] sm:$0xff]
  %v1672 = vld [vmem:[%s1 + $0x250] sm:$0xff]
  %v1673 = vld [vmem:[%s1 + $0x258] sm:$0xff]
  %v1674 = vld [vmem:[%s1 + $0x260] sm:$0xff]
  %v1675 = vld [vmem:[%s1 + $0x268] sm:$0xff]
  %v1676 = vld [vmem:[%s1 + $0x270] sm:$0xff]
  %v1677 = vld [vmem:[%s1 + $0x278] sm:$0xff]
  %v1678 = vld [vmem:[%s1 + $0x280] sm:$0xff]
  %v1679 = vld [vmem:[%s1 + $0x288] sm:$0xff]
  %v1680 = vld [vmem:[%s1 + $0x290] sm:$0xff]
  %v1681 = vld [vmem:[%s1 + $0x298] sm:$0xff]
  %v1682 = vld [vmem:[%s1 + $0x2a0] sm:$0xff]
  %v1683 = vld [vmem:[%s1 + $0x2a8] sm:$0xff]
  %v1684 = vld [vmem:[%s1 + $0x2b0] sm:$0xff]
  %v1685 = vld [vmem:[%s1 + $0x2b8] sm:$0xff]
  %v1686 = vld [vmem:[%s1 + $0x2c0] sm:$0xff]
  %v1687 = vld [vmem:[%s1 + $0x2c8] sm:$0xff]
  %v1688 = vld [vmem:[%s1 + $0x2d0] sm:$0xff]
  %v1689 = vld [vmem:[%s1 + $0x2d8] sm:$0xff]
  %v1690 = vld [vmem:[%s1 + $0x2e0] sm:$0xff]
  %v1691 = vld [vmem:[%s1 + $0x2e8] sm:$0xff]
  %v1692 = vld [vmem:[%s1 + $0x2f0] sm:$0xff]
  %v1693 = vld [vmem:[%s1 + $0x2f8] sm:$0xff]
  %v1694 = vld [vmem:[%s1 + $0x300] sm:$0xff]
  %v1695 = vld [vmem:[%s1 + $0x308] sm:$0xff]
  %v1696 = vld [vmem:[%s1 + $0x310] sm:$0xff]
  %v1697 = vld [vmem:[%s1 + $0x318] sm:$0xff]
  %v1698 = vld [vmem:[%s1 + $0x320] sm:$0xff]
  %v1699 = vld [vmem:[%s1 + $0x328] sm:$0xff]
  %v1700 = vld [vmem:[%s1 + $0x330] sm:$0xff]
  %v1701 = vld [vmem:[%s1 + $0x338] sm:$0xff]
  %v1702 = vld [vmem:[%s1 + $0x340] sm:$0xff]
  %v1703 = vld [vmem:[%s1 + $0x348] sm:$0xff]
  %v1704 = vld [vmem:[%s1 + $0x350] sm:$0xff]
  %v1705 = vld [vmem:[%s1 + $0x358] sm:$0xff]
  %v1706 = vld [vmem:[%s1 + $0x360] sm:$0xff]
  %v1707 = vld [vmem:[%s1 + $0x368] sm:$0xff]
  %v1708 = vld [vmem:[%s1 + $0x370] sm:$0xff]
  %v1709 = vld [vmem:[%s1 + $0x378] sm:$0xff]
  %v1710 = vld [vmem:[%s1 + $0x380] sm:$0xff]
  %v1711 = vld [vmem:[%s1 + $0x388] sm:$0xff]
  %v1712 = vld [vmem:[%s1 + $0x390] sm:$0xff]
  %v1713 = vld [vmem:[%s1 + $0x398] sm:$0xff]
  %v1714 = vld [vmem:[%s1 + $0x3a0] sm:$0xff]
  %v1715 = vld [vmem:[%s1 + $0x3a8] sm:$0xff]
  %v1716 = vld [vmem:[%s1 + $0x3b0] sm:$0xff]
  %v1717 = vld [vmem:[%s1 + $0x3b8] sm:$0xff]
  %v1718 = vld [vmem:[%s1 + $0x3c0] sm:$0xff]
  %v1719 = vld [vmem:[%s1 + $0x3c8] sm:$0xff]
  %v1720 = vld [vmem:[%s1 + $0x3d0] sm:$0xff]
  %v1721 = vld [vmem:[%s1 + $0x3d8] sm:$0xff]
  %v1722 = vld [vmem:[%s1 + $0x3e0] sm:$0xff]
  %v1723 = vld [vmem:[%s1 + $0x3e8] sm:$0xff]
  %v1724 = vld [vmem:[%s1 + $0x3f0] sm:$0xff]
  %v1725 = vld [vmem:[%s1 + $0x3f8] sm:$0xff]
  %v1726 = vld [vmem:[%s2] sm:$0xf]
  %v1728 = vperm.slane %v1726, 0
  %v1729 = vperm.slane %v1726, 1
  %v1730 = vperm.slane %v1726, 2
  %v1731 = vperm.slane %v1726, 3
  %1736 = vmatpush.msra.mxu0 %v1658
  %1737 = vmatpush.msra.mxu0 %v1654
  %1738 = vmatpush.msra.mxu0 %v1650
  %1739 = vmatpush.msra.mxu0 %v1646
  %1740 = vmatpush.msra.mxu0 %v1642
  %1741 = vmatpush.msra.mxu0 %v1638
  %1742 = vmatpush.msra.mxu0 %v1634
  %1743 = vmatpush.msra.mxu0 %v1630
  %1744 = vmatpush.msra.mxu0 %v1626
  %1745 = vmatpush.msra.mxu0 %v1622
  %1746 = vmatpush.msra.mxu0 %v1618
  %1747 = vmatpush.msra.mxu0 %v1614
  %1748 = vmatpush.msra.mxu0 %v1610
  %1749 = vmatpush.msra.mxu0 %v1606
  %1750 = vmatpush.msra.mxu0 %v1602
  %1751 = vmatpush.msra.mxu0 %v1598
  %1752 = vmatmul.f32.gmra.mxu0 %v1590
  %v1753 = vpop.f32.mrf.mxu0
  %v1754 = vadd.f32 %v1728, %v1753
  %1755 = vmatmul.f32.gmra.mxu0 %v1592
  %v1756 = vpop.f32.mrf.mxu0
  %v1757 = vadd.f32 %v1728, %v1756
  %1758 = vmatmul.f32.gmra.mxu0 %v1594
  %v1759 = vpop.f32.mrf.mxu0
  %v1760 = vadd.f32 %v1728, %v1759
  %1761 = vmatmul.f32.gmra.mxu0 %v1596
  %v1762 = vpop.f32.mrf.mxu0
  %v1763 = vadd.f32 %v1728, %v1762
  %1764 = vdwg.mxu0
  %1765 = vmatpush.msra.mxu0 %v1722
  %1766 = vmatpush.msra.mxu0 %v1718
  %1767 = vmatpush.msra.mxu0 %v1714
  %1768 = vmatpush.msra.mxu0 %v1710
  %1769 = vmatpush.msra.mxu0 %v1706
  %1770 = vmatpush.msra.mxu0 %v1702
  %1771 = vmatpush.msra.mxu0 %v1698
  %1772 = vmatpush.msra.mxu0 %v1694
  %1773 = vmatpush.msra.mxu0 %v1690
  %1774 = vmatpush.msra.mxu0 %v1686
  %1775 = vmatpush.msra.mxu0 %v1682
  %1776 = vmatpush.msra.mxu0 %v1678
  %1777 = vmatpush.msra.mxu0 %v1674
  %1778 = vmatpush.msra.mxu0 %v1670
  %1779 = vmatpush.msra.mxu0 %v1666
  %1780 = vmatpush.msra.mxu0 %v1662
  %1781 = vmatmul.f32.gmra.mxu0 %v1591
  %v1782 = vpop.f32.mrf.mxu0
  %v1783 = vadd.f32 %v1754, %v1782
  %1784 = vmatmul.f32.gmra.mxu0 %v1593
  %v1785 = vpop.f32.mrf.mxu0
  %v1786 = vadd.f32 %v1757, %v1785
  %1787 = vmatmul.f32.gmra.mxu0 %v1595
  %v1788 = vpop.f32.mrf.mxu0
  %v1789 = vadd.f32 %v1760, %v1788
  %1790 = vmatmul.f32.gmra.mxu0 %v1597
  %v1791 = vpop.f32.mrf.mxu0
  %v1792 = vadd.f32 %v1763, %v1791
  %1793 = vdwg.mxu0
  %1794 = vmatpush.msra.mxu0 %v1659
  %1795 = vmatpush.msra.mxu0 %v1655
  %1796 = vmatpush.msra.mxu0 %v1651
  %1797 = vmatpush.msra.mxu0 %v1647
  %1798 = vmatpush.msra.mxu0 %v1643
  %1799 = vmatpush.msra.mxu0 %v1639
  %1800 = vmatpush.msra.mxu0 %v1635
  %1801 = vmatpush.msra.mxu0 %v1631
  %1802 = vmatpush.msra.mxu0 %v1627
  %1803 = vmatpush.msra.mxu0 %v1623
  %1804 = vmatpush.msra.mxu0 %v1619
  %1805 = vmatpush.msra.mxu0 %v1615
  %1806 = vmatpush.msra.mxu0 %v1611
  %1807 = vmatpush.msra.mxu0 %v1607
  %1808 = vmatpush.msra.mxu0 %v1603
  %1809 = vmatpush.msra.mxu0 %v1599
  %1810 = vmatmul.f32.gmra.mxu0 %v1590
  %v1811 = vpop.f32.mrf.mxu0
  %v1812 = vadd.f32 %v1729, %v1811
  %1813 = vmatmul.f32.gmra.mxu0 %v1592
  %v1814 = vpop.f32.mrf.mxu0
  %v1815 = vadd.f32 %v1729, %v1814
  %1816 = vmatmul.f32.gmra.mxu0 %v1594
  %v1817 = vpop.f32.mrf.mxu0
  %v1818 = vadd.f32 %v1729, %v1817
  %1819 = vmatmul.f32.gmra.mxu0 %v1596
  %v1820 = vpop.f32.mrf.mxu0
  %v1821 = vadd.f32 %v1729, %v1820
  %1822 = vdwg.mxu0
  %1823 = vmatpush.msra.mxu0 %v1723
  %1824 = vmatpush.msra.mxu0 %v1719
  %1825 = vmatpush.msra.mxu0 %v1715
  %1826 = vmatpush.msra.mxu0 %v1711
  %1827 = vmatpush.msra.mxu0 %v1707
  %1828 = vmatpush.msra.mxu0 %v1703
  %1829 = vmatpush.msra.mxu0 %v1699
  %1830 = vmatpush.msra.mxu0 %v1695
  %1831 = vmatpush.msra.mxu0 %v1691
  %1832 = vmatpush.msra.mxu0 %v1687
  %1833 = vmatpush.msra.mxu0 %v1683
  %1834 = vmatpush.msra.mxu0 %v1679
  %1835 = vmatpush.msra.mxu0 %v1675
  %1836 = vmatpush.msra.mxu0 %v1671
  %1837 = vmatpush.msra.mxu0 %v1667
  %1838 = vmatpush.msra.mxu0 %v1663
  %1839 = vmatmul.f32.gmra.mxu0 %v1591
  %v1840 = vpop.f32.mrf.mxu0
  %v1841 = vadd.f32 %v1812, %v1840
  %1842 = vmatmul.f32.gmra.mxu0 %v1593
  %v1843 = vpop.f32.mrf.mxu0
  %v1844 = vadd.f32 %v1815, %v1843
  %1845 = vmatmul.f32.gmra.mxu0 %v1595
  %v1846 = vpop.f32.mrf.mxu0
  %v1847 = vadd.f32 %v1818, %v1846
  %1848 = vmatmul.f32.gmra.mxu0 %v1597
  %v1849 = vpop.f32.mrf.mxu0
  %v1850 = vadd.f32 %v1821, %v1849
  %1851 = vdwg.mxu0
  %1852 = vmatpush.msra.mxu0 %v1660
  %1853 = vmatpush.msra.mxu0 %v1656
  %1854 = vmatpush.msra.mxu0 %v1652
  %1855 = vmatpush.msra.mxu0 %v1648
  %1856 = vmatpush.msra.mxu0 %v1644
  %1857 = vmatpush.msra.mxu0 %v1640
  %1858 = vmatpush.msra.mxu0 %v1636
  %1859 = vmatpush.msra.mxu0 %v1632
  %1860 = vmatpush.msra.mxu0 %v1628
  %1861 = vmatpush.msra.mxu0 %v1624
  %1862 = vmatpush.msra.mxu0 %v1620
  %1863 = vmatpush.msra.mxu0 %v1616
  %1864 = vmatpush.msra.mxu0 %v1612
  %1865 = vmatpush.msra.mxu0 %v1608
  %1866 = vmatpush.msra.mxu0 %v1604
  %1867 = vmatpush.msra.mxu0 %v1600
  %1868 = vmatmul.f32.gmra.mxu0 %v1590
  %v1869 = vpop.f32.mrf.mxu0
  %v1870 = vadd.f32 %v1730, %v1869
  %1871 = vmatmul.f32.gmra.mxu0 %v1592
  %v1872 = vpop.f32.mrf.mxu0
  %v1873 = vadd.f32 %v1730, %v1872
  %1874 = vmatmul.f32.gmra.mxu0 %v1594
  %v1875 = vpop.f32.mrf.mxu0
  %v1876 = vadd.f32 %v1730, %v1875
  %1877 = vmatmul.f32.gmra.mxu0 %v1596
  %v1878 = vpop.f32.mrf.mxu0
  %v1879 = vadd.f32 %v1730, %v1878
  %1880 = vdwg.mxu0
  %1881 = vmatpush.msra.mxu0 %v1724
  %1882 = vmatpush.msra.mxu0 %v1720
  %1883 = vmatpush.msra.mxu0 %v1716
  %1884 = vmatpush.msra.mxu0 %v1712
  %1885 = vmatpush.msra.mxu0 %v1708
  %1886 = vmatpush.msra.mxu0 %v1704
  %1887 = vmatpush.msra.mxu0 %v1700
  %1888 = vmatpush.msra.mxu0 %v1696
  %1889 = vmatpush.msra.mxu0 %v1692
  %1890 = vmatpush.msra.mxu0 %v1688
  %1891 = vmatpush.msra.mxu0 %v1684
  %1892 = vmatpush.msra.mxu0 %v1680
  %1893 = vmatpush.msra.mxu0 %v1676
  %1894 = vmatpush.msra.mxu0 %v1672
  %1895 = vmatpush.msra.mxu0 %v1668
  %1896 = vmatpush.msra.mxu0 %v1664
  %1897 = vmatmul.f32.gmra.mxu0 %v1591
  %v1898 = vpop.f32.mrf.mxu0
  %v1899 = vadd.f32 %v1870, %v1898
  %1900 = vmatmul.f32.gmra.mxu0 %v1593
  %v1901 = vpop.f32.mrf.mxu0
  %v1902 = vadd.f32 %v1873, %v1901
  %1903 = vmatmul.f32.gmra.mxu0 %v1595
  %v1904 = vpop.f32.mrf.mxu0
  %v1905 = vadd.f32 %v1876, %v1904
  %1906 = vmatmul.f32.gmra.mxu0 %v1597
  %v1907 = vpop.f32.mrf.mxu0
  %v1908 = vadd.f32 %v1879, %v1907
  %1909 = vdwg.mxu0
  %1910 = vmatpush.msra.mxu0 %v1661
  %1911 = vmatpush.msra.mxu0 %v1657
  %1912 = vmatpush.msra.mxu0 %v1653
  %1913 = vmatpush.msra.mxu0 %v1649
  %1914 = vmatpush.msra.mxu0 %v1645
  %1915 = vmatpush.msra.mxu0 %v1641
  %1916 = vmatpush.msra.mxu0 %v1637
  %1917 = vmatpush.msra.mxu0 %v1633
  %1918 = vmatpush.msra.mxu0 %v1629
  %1919 = vmatpush.msra.mxu0 %v1625
  %1920 = vmatpush.msra.mxu0 %v1621
  %1921 = vmatpush.msra.mxu0 %v1617
  %1922 = vmatpush.msra.mxu0 %v1613
  %1923 = vmatpush.msra.mxu0 %v1609
  %1924 = vmatpush.msra.mxu0 %v1605
  %1925 = vmatpush.msra.mxu0 %v1601
  %1926 = vmatmul.f32.gmra.mxu0 %v1590
  %v1927 = vpop.f32.mrf.mxu0
  %v1928 = vadd.f32 %v1731, %v1927
  %1929 = vmatmul.f32.gmra.mxu0 %v1592
  %v1930 = vpop.f32.mrf.mxu0
  %v1931 = vadd.f32 %v1731, %v1930
  %1932 = vmatmul.f32.gmra.mxu0 %v1594
  %v1933 = vpop.f32.mrf.mxu0
  %v1934 = vadd.f32 %v1731, %v1933
  %1935 = vmatmul.f32.gmra.mxu0 %v1596
  %v1936 = vpop.f32.mrf.mxu0
  %v1937 = vadd.f32 %v1731, %v1936
  %1938 = vdwg.mxu0
  %1939 = vmatpush.msra.mxu0 %v1725
  %1940 = vmatpush.msra.mxu0 %v1721
  %1941 = vmatpush.msra.mxu0 %v1717
  %1942 = vmatpush.msra.mxu0 %v1713
  %1943 = vmatpush.msra.mxu0 %v1709
  %1944 = vmatpush.msra.mxu0 %v1705
  %1945 = vmatpush.msra.mxu0 %v1701
  %1946 = vmatpush.msra.mxu0 %v1697
  %1947 = vmatpush.msra.mxu0 %v1693
  %1948 = vmatpush.msra.mxu0 %v1689
  %1949 = vmatpush.msra.mxu0 %v1685
  %1950 = vmatpush.msra.mxu0 %v1681
  %1951 = vmatpush.msra.mxu0 %v1677
  %1952 = vmatpush.msra.mxu0 %v1673
  %1953 = vmatpush.msra.mxu0 %v1669
  %1954 = vmatpush.msra.mxu0 %v1665
  %1955 = vmatmul.f32.gmra.mxu0 %v1591
  %v1956 = vpop.f32.mrf.mxu0
  %v1957 = vadd.f32 %v1928, %v1956
  %1958 = vmatmul.f32.gmra.mxu0 %v1593
  %v1959 = vpop.f32.mrf.mxu0
  %v1960 = vadd.f32 %v1931, %v1959
  %1961 = vmatmul.f32.gmra.mxu0 %v1595
  %v1962 = vpop.f32.mrf.mxu0
  %v1963 = vadd.f32 %v1934, %v1962
  %1964 = vmatmul.f32.gmra.mxu0 %v1597
  %v1965 = vpop.f32.mrf.mxu0
  %v1966 = vadd.f32 %v1937, %v1965
  %1967 = vdwg.mxu0
  %1968 = vst [vmem:[%s3 + $0x80] sm:$0xff] %v1783
  %1969 = vst [vmem:[%s3 + $0x88] sm:$0xff] %v1841
  %1970 = vst [vmem:[%s3 + $0x90] sm:$0xff] %v1899
  %1971 = vst [vmem:[%s3 + $0x98] sm:$0xff] %v1957
  %1972 = vst [vmem:[%s3 + $0x140] sm:$0xff] %v1786
  %1973 = vst [vmem:[%s3 + $0x148] sm:$0xff] %v1844
  %1974 = vst [vmem:[%s3 + $0x150] sm:$0xff] %v1902
  %1975 = vst [vmem:[%s3 + $0x158] sm:$0xff] %v1960
  %1976 = vst [vmem:[%s3 + $0x200] sm:$0xff] %v1789
  %1977 = vst [vmem:[%s3 + $0x208] sm:$0xff] %v1847
  %1978 = vst [vmem:[%s3 + $0x210] sm:$0xff] %v1905
  %1979 = vst [vmem:[%s3 + $0x218] sm:$0xff] %v1963
  %1980 = vst [vmem:[%s3 + $0x2c0] sm:$0xff] %v1792
  %1981 = vst [vmem:[%s3 + $0x2c8] sm:$0xff] %v1850
  %1982 = vst [vmem:[%s3 + $0x2d0] sm:$0xff] %v1908
  %1983 = vst [vmem:[%s3 + $0x2d8] sm:$0xff] %v1966
  %v1984 = vld [vmem:[%s0 + $0x50] sm:$0xff]
  %v1985 = vld [vmem:[%s0 + $0x58] sm:$0xff]
  %v1986 = vld [vmem:[%s0 + $0xb0] sm:$0xff]
  %v1987 = vld [vmem:[%s0 + $0xb8] sm:$0xff]
  %v1988 = vld [vmem:[%s0 + $0x110] sm:$0xff]
  %v1989 = vld [vmem:[%s0 + $0x118] sm:$0xff]
  %v1990 = vld [vmem:[%s0 + $0x170] sm:$0xff]
  %v1991 = vld [vmem:[%s0 + $0x178] sm:$0xff]
  %v1992 = vld [vmem:[%s1] sm:$0xff]
  %v1993 = vld [vmem:[%s1 + $0x8] sm:$0xff]
  %v1994 = vld [vmem:[%s1 + $0x10] sm:$0xff]
  %v1995 = vld [vmem:[%s1 + $0x18] sm:$0xff]
  %v1996 = vld [vmem:[%s1 + $0x20] sm:$0xff]
  %v1997 = vld [vmem:[%s1 + $0x28] sm:$0xff]
  %v1998 = vld [vmem:[%s1 + $0x30] sm:$0xff]
  %v1999 = vld [vmem:[%s1 + $0x38] sm:$0xff]
  %v2000 = vld [vmem:[%s1 + $0x40] sm:$0xff]
  %v2001 = vld [vmem:[%s1 + $0x48] sm:$0xff]
  %v2002 = vld [vmem:[%s1 + $0x50] sm:$0xff]
  %v2003 = vld [vmem:[%s1 + $0x58] sm:$0xff]
  %v2004 = vld [vmem:[%s1 + $0x60] sm:$0xff]
  %v2005 = vld [vmem:[%s1 + $0x68] sm:$0xff]
  %v2006 = vld [vmem:[%s1 + $0x70] sm:$0xff]
  %v2007 = vld [vmem:[%s1 + $0x78] sm:$0xff]
  %v2008 = vld [vmem:[%s1 + $0x80] sm:$0xff]
  %v2009 = vld [vmem:[%s1 + $0x88] sm:$0xff]
  %v2010 = vld [vmem:[%s1 + $0x90] sm:$0xff]
  %v2011 = vld [vmem:[%s1 + $0x98] sm:$0xff]
  %v2012 = vld [vmem:[%s1 + $0xa0] sm:$0xff]
  %v2013 = vld [vmem:[%s1 + $0xa8] sm:$0xff]
  %v2014 = vld [vmem:[%s1 + $0xb0] sm:$0xff]
  %v2015 = vld [vmem:[%s1 + $0xb8] sm:$0xff]
  %v2016 = vld [vmem:[%s1 + $0xc0] sm:$0xff]
  %v2017 = vld [vmem:[%s1 + $0xc8] sm:$0xff]
  %v2018 = vld [vmem:[%s1 + $0xd0] sm:$0xff]
  %v2019 = vld [vmem:[%s1 + $0xd8] sm:$0xff]
  %v2020 = vld [vmem:[%s1 + $0xe0] sm:$0xff]
  %v2021 = vld [vmem:[%s1 + $0xe8] sm:$0xff]
  %v2022 = vld [vmem:[%s1 + $0xf0] sm:$0xff]
  %v2023 = vld [vmem:[%s1 + $0xf8] sm:$0xff]
  %v2024 = vld [vmem:[%s1 + $0x100] sm:$0xff]
  %v2025 = vld [vmem:[%s1 + $0x108] sm:$0xff]
  %v2026 = vld [vmem:[%s1 + $0x110] sm:$0xff]
  %v2027 = vld [vmem:[%s1 + $0x118] sm:$0xff]
  %v2028 = vld [vmem:[%s1 + $0x120] sm:$0xff]
  %v2029 = vld [vmem:[%s1 + $0x128] sm:$0xff]
  %v2030 = vld [vmem:[%s1 + $0x130] sm:$0xff]
  %v2031 = vld [vmem:[%s1 + $0x138] sm:$0xff]
  %v2032 = vld [vmem:[%s1 + $0x140] sm:$0xff]
  %v2033 = vld [vmem:[%s1 + $0x148] sm:$0xff]
  %v2034 = vld [vmem:[%s1 + $0x150] sm:$0xff]
  %v2035 = vld [vmem:[%s1 + $0x158] sm:$0xff]
  %v2036 = vld [vmem:[%s1 + $0x160] sm:$0xff]
  %v2037 = vld [vmem:[%s1 + $0x168] sm:$0xff]
  %v2038 = vld [vmem:[%s1 + $0x170] sm:$0xff]
  %v2039 = vld [vmem:[%s1 + $0x178] sm:$0xff]
  %v2040 = vld [vmem:[%s1 + $0x180] sm:$0xff]
  %v2041 = vld [vmem:[%s1 + $0x188] sm:$0xff]
  %v2042 = vld [vmem:[%s1 + $0x190] sm:$0xff]
  %v2043 = vld [vmem:[%s1 + $0x198] sm:$0xff]
  %v2044 = vld [vmem:[%s1 + $0x1a0] sm:$0xff]
  %v2045 = vld [vmem:[%s1 + $0x1a8] sm:$0xff]
  %v2046 = vld [vmem:[%s1 + $0x1b0] sm:$0xff]
  %v2047 = vld [vmem:[%s1 + $0x1b8] sm:$0xff]
  %v2048 = vld [vmem:[%s1 + $0x1c0] sm:$0xff]
  %v2049 = vld [vmem:[%s1 + $0x1c8] sm:$0xff]
  %v2050 = vld [vmem:[%s1 + $0x1d0] sm:$0xff]
  %v2051 = vld [vmem:[%s1 + $0x1d8] sm:$0xff]
  %v2052 = vld [vmem:[%s1 + $0x1e0] sm:$0xff]
  %v2053 = vld [vmem:[%s1 + $0x1e8] sm:$0xff]
  %v2054 = vld [vmem:[%s1 + $0x1f0] sm:$0xff]
  %v2055 = vld [vmem:[%s1 + $0x1f8] sm:$0xff]
  %v2056 = vld [vmem:[%s1 + $0x200] sm:$0xff]
  %v2057 = vld [vmem:[%s1 + $0x208] sm:$0xff]
  %v2058 = vld [vmem:[%s1 + $0x210] sm:$0xff]
  %v2059 = vld [vmem:[%s1 + $0x218] sm:$0xff]
  %v2060 = vld [vmem:[%s1 + $0x220] sm:$0xff]
  %v2061 = vld [vmem:[%s1 + $0x228] sm:$0xff]
  %v2062 = vld [vmem:[%s1 + $0x230] sm:$0xff]
  %v2063 = vld [vmem:[%s1 + $0x238] sm:$0xff]
  %v2064 = vld [vmem:[%s1 + $0x240] sm:$0xff]
  %v2065 = vld [vmem:[%s1 + $0x248] sm:$0xff]
  %v2066 = vld [vmem:[%s1 + $0x250] sm:$0xff]
  %v2067 = vld [vmem:[%s1 + $0x258] sm:$0xff]
  %v2068 = vld [vmem:[%s1 + $0x260] sm:$0xff]
  %v2069 = vld [vmem:[%s1 + $0x268] sm:$0xff]
  %v2070 = vld [vmem:[%s1 + $0x270] sm:$0xff]
  %v2071 = vld [vmem:[%s1 + $0x278] sm:$0xff]
  %v2072 = vld [vmem:[%s1 + $0x280] sm:$0xff]
  %v2073 = vld [vmem:[%s1 + $0x288] sm:$0xff]
  %v2074 = vld [vmem:[%s1 + $0x290] sm:$0xff]
  %v2075 = vld [vmem:[%s1 + $0x298] sm:$0xff]
  %v2076 = vld [vmem:[%s1 + $0x2a0] sm:$0xff]
  %v2077 = vld [vmem:[%s1 + $0x2a8] sm:$0xff]
  %v2078 = vld [vmem:[%s1 + $0x2b0] sm:$0xff]
  %v2079 = vld [vmem:[%s1 + $0x2b8] sm:$0xff]
  %v2080 = vld [vmem:[%s1 + $0x2c0] sm:$0xff]
  %v2081 = vld [vmem:[%s1 + $0x2c8] sm:$0xff]
  %v2082 = vld [vmem:[%s1 + $0x2d0] sm:$0xff]
  %v2083 = vld [vmem:[%s1 + $0x2d8] sm:$0xff]
  %v2084 = vld [vmem:[%s1 + $0x2e0] sm:$0xff]
  %v2085 = vld [vmem:[%s1 + $0x2e8] sm:$0xff]
  %v2086 = vld [vmem:[%s1 + $0x2f0] sm:$0xff]
  %v2087 = vld [vmem:[%s1 + $0x2f8] sm:$0xff]
  %v2088 = vld [vmem:[%s1 + $0x300] sm:$0xff]
  %v2089 = vld [vmem:[%s1 + $0x308] sm:$0xff]
  %v2090 = vld [vmem:[%s1 + $0x310] sm:$0xff]
  %v2091 = vld [vmem:[%s1 + $0x318] sm:$0xff]
  %v2092 = vld [vmem:[%s1 + $0x320] sm:$0xff]
  %v2093 = vld [vmem:[%s1 + $0x328] sm:$0xff]
  %v2094 = vld [vmem:[%s1 + $0x330] sm:$0xff]
  %v2095 = vld [vmem:[%s1 + $0x338] sm:$0xff]
  %v2096 = vld [vmem:[%s1 + $0x340] sm:$0xff]
  %v2097 = vld [vmem:[%s1 + $0x348] sm:$0xff]
  %v2098 = vld [vmem:[%s1 + $0x350] sm:$0xff]
  %v2099 = vld [vmem:[%s1 + $0x358] sm:$0xff]
  %v2100 = vld [vmem:[%s1 + $0x360] sm:$0xff]
  %v2101 = vld [vmem:[%s1 + $0x368] sm:$0xff]
  %v2102 = vld [vmem:[%s1 + $0x370] sm:$0xff]
  %v2103 = vld [vmem:[%s1 + $0x378] sm:$0xff]
  %v2104 = vld [vmem:[%s1 + $0x380] sm:$0xff]
  %v2105 = vld [vmem:[%s1 + $0x388] sm:$0xff]
  %v2106 = vld [vmem:[%s1 + $0x390] sm:$0xff]
  %v2107 = vld [vmem:[%s1 + $0x398] sm:$0xff]
  %v2108 = vld [vmem:[%s1 + $0x3a0] sm:$0xff]
  %v2109 = vld [vmem:[%s1 + $0x3a8] sm:$0xff]
  %v2110 = vld [vmem:[%s1 + $0x3b0] sm:$0xff]
  %v2111 = vld [vmem:[%s1 + $0x3b8] sm:$0xff]
  %v2112 = vld [vmem:[%s1 + $0x3c0] sm:$0xff]
  %v2113 = vld [vmem:[%s1 + $0x3c8] sm:$0xff]
  %v2114 = vld [vmem:[%s1 + $0x3d0] sm:$0xff]
  %v2115 = vld [vmem:[%s1 + $0x3d8] sm:$0xff]
  %v2116 = vld [vmem:[%s1 + $0x3e0] sm:$0xff]
  %v2117 = vld [vmem:[%s1 + $0x3e8] sm:$0xff]
  %v2118 = vld [vmem:[%s1 + $0x3f0] sm:$0xff]
  %v2119 = vld [vmem:[%s1 + $0x3f8] sm:$0xff]
  %v2120 = vld [vmem:[%s2] sm:$0xf]
  %v2122 = vperm.slane %v2120, 0
  %v2123 = vperm.slane %v2120, 1
  %v2124 = vperm.slane %v2120, 2
  %v2125 = vperm.slane %v2120, 3
  %2130 = vmatpush.msra.mxu0 %v2052
  %2131 = vmatpush.msra.mxu0 %v2048
  %2132 = vmatpush.msra.mxu0 %v2044
  %2133 = vmatpush.msra.mxu0 %v2040
  %2134 = vmatpush.msra.mxu0 %v2036
  %2135 = vmatpush.msra.mxu0 %v2032
  %2136 = vmatpush.msra.mxu0 %v2028
  %2137 = vmatpush.msra.mxu0 %v2024
  %2138 = vmatpush.msra.mxu0 %v2020
  %2139 = vmatpush.msra.mxu0 %v2016
  %2140 = vmatpush.msra.mxu0 %v2012
  %2141 = vmatpush.msra.mxu0 %v2008
  %2142 = vmatpush.msra.mxu0 %v2004
  %2143 = vmatpush.msra.mxu0 %v2000
  %2144 = vmatpush.msra.mxu0 %v1996
  %2145 = vmatpush.msra.mxu0 %v1992
  %2146 = vmatmul.f32.gmra.mxu0 %v1984
  %v2147 = vpop.f32.mrf.mxu0
  %v2148 = vadd.f32 %v2122, %v2147
  %2149 = vmatmul.f32.gmra.mxu0 %v1986
  %v2150 = vpop.f32.mrf.mxu0
  %v2151 = vadd.f32 %v2122, %v2150
  %2152 = vmatmul.f32.gmra.mxu0 %v1988
  %v2153 = vpop.f32.mrf.mxu0
  %v2154 = vadd.f32 %v2122, %v2153
  %2155 = vmatmul.f32.gmra.mxu0 %v1990
  %v2156 = vpop.f32.mrf.mxu0
  %v2157 = vadd.f32 %v2122, %v2156
  %2158 = vdwg.mxu0
  %2159 = vmatpush.msra.mxu0 %v2116
  %2160 = vmatpush.msra.mxu0 %v2112
  %2161 = vmatpush.msra.mxu0 %v2108
  %2162 = vmatpush.msra.mxu0 %v2104
  %2163 = vmatpush.msra.mxu0 %v2100
  %2164 = vmatpush.msra.mxu0 %v2096
  %2165 = vmatpush.msra.mxu0 %v2092
  %2166 = vmatpush.msra.mxu0 %v2088
  %2167 = vmatpush.msra.mxu0 %v2084
  %2168 = vmatpush.msra.mxu0 %v2080
  %2169 = vmatpush.msra.mxu0 %v2076
  %2170 = vmatpush.msra.mxu0 %v2072
  %2171 = vmatpush.msra.mxu0 %v2068
  %2172 = vmatpush.msra.mxu0 %v2064
  %2173 = vmatpush.msra.mxu0 %v2060
  %2174 = vmatpush.msra.mxu0 %v2056
  %2175 = vmatmul.f32.gmra.mxu0 %v1985
  %v2176 = vpop.f32.mrf.mxu0
  %v2177 = vadd.f32 %v2148, %v2176
  %2178 = vmatmul.f32.gmra.mxu0 %v1987
  %v2179 = vpop.f32.mrf.mxu0
  %v2180 = vadd.f32 %v2151, %v2179
  %2181 = vmatmul.f32.gmra.mxu0 %v1989
  %v2182 = vpop.f32.mrf.mxu0
  %v2183 = vadd.f32 %v2154, %v2182
  %2184 = vmatmul.f32.gmra.mxu0 %v1991
  %v2185 = vpop.f32.mrf.mxu0
  %v2186 = vadd.f32 %v2157, %v2185
  %2187 = vdwg.mxu0
  %2188 = vmatpush.msra.mxu0 %v2053
  %2189 = vmatpush.msra.mxu0 %v2049
  %2190 = vmatpush.msra.mxu0 %v2045
  %2191 = vmatpush.msra.mxu0 %v2041
  %2192 = vmatpush.msra.mxu0 %v2037
  %2193 = vmatpush.msra.mxu0 %v2033
  %2194 = vmatpush.msra.mxu0 %v2029
  %2195 = vmatpush.msra.mxu0 %v2025
  %2196 = vmatpush.msra.mxu0 %v2021
  %2197 = vmatpush.msra.mxu0 %v2017
  %2198 = vmatpush.msra.mxu0 %v2013
  %2199 = vmatpush.msra.mxu0 %v2009
  %2200 = vmatpush.msra.mxu0 %v2005
  %2201 = vmatpush.msra.mxu0 %v2001
  %2202 = vmatpush.msra.mxu0 %v1997
  %2203 = vmatpush.msra.mxu0 %v1993
  %2204 = vmatmul.f32.gmra.mxu0 %v1984
  %v2205 = vpop.f32.mrf.mxu0
  %v2206 = vadd.f32 %v2123, %v2205
  %2207 = vmatmul.f32.gmra.mxu0 %v1986
  %v2208 = vpop.f32.mrf.mxu0
  %v2209 = vadd.f32 %v2123, %v2208
  %2210 = vmatmul.f32.gmra.mxu0 %v1988
  %v2211 = vpop.f32.mrf.mxu0
  %v2212 = vadd.f32 %v2123, %v2211
  %2213 = vmatmul.f32.gmra.mxu0 %v1990
  %v2214 = vpop.f32.mrf.mxu0
  %v2215 = vadd.f32 %v2123, %v2214
  %2216 = vdwg.mxu0
  %2217 = vmatpush.msra.mxu0 %v2117
  %2218 = vmatpush.msra.mxu0 %v2113
  %2219 = vmatpush.msra.mxu0 %v2109
  %2220 = vmatpush.msra.mxu0 %v2105
  %2221 = vmatpush.msra.mxu0 %v2101
  %2222 = vmatpush.msra.mxu0 %v2097
  %2223 = vmatpush.msra.mxu0 %v2093
  %2224 = vmatpush.msra.mxu0 %v2089
  %2225 = vmatpush.msra.mxu0 %v2085
  %2226 = vmatpush.msra.mxu0 %v2081
  %2227 = vmatpush.msra.mxu0 %v2077
  %2228 = vmatpush.msra.mxu0 %v2073
  %2229 = vmatpush.msra.mxu0 %v2069
  %2230 = vmatpush.msra.mxu0 %v2065
  %2231 = vmatpush.msra.mxu0 %v2061
  %2232 = vmatpush.msra.mxu0 %v2057
  %2233 = vmatmul.f32.gmra.mxu0 %v1985
  %v2234 = vpop.f32.mrf.mxu0
  %v2235 = vadd.f32 %v2206, %v2234
  %2236 = vmatmul.f32.gmra.mxu0 %v1987
  %v2237 = vpop.f32.mrf.mxu0
  %v2238 = vadd.f32 %v2209, %v2237
  %2239 = vmatmul.f32.gmra.mxu0 %v1989
  %v2240 = vpop.f32.mrf.mxu0
  %v2241 = vadd.f32 %v2212, %v2240
  %2242 = vmatmul.f32.gmra.mxu0 %v1991
  %v2243 = vpop.f32.mrf.mxu0
  %v2244 = vadd.f32 %v2215, %v2243
  %2245 = vdwg.mxu0
  %2246 = vmatpush.msra.mxu0 %v2054
  %2247 = vmatpush.msra.mxu0 %v2050
  %2248 = vmatpush.msra.mxu0 %v2046
  %2249 = vmatpush.msra.mxu0 %v2042
  %2250 = vmatpush.msra.mxu0 %v2038
  %2251 = vmatpush.msra.mxu0 %v2034
  %2252 = vmatpush.msra.mxu0 %v2030
  %2253 = vmatpush.msra.mxu0 %v2026
  %2254 = vmatpush.msra.mxu0 %v2022
  %2255 = vmatpush.msra.mxu0 %v2018
  %2256 = vmatpush.msra.mxu0 %v2014
  %2257 = vmatpush.msra.mxu0 %v2010
  %2258 = vmatpush.msra.mxu0 %v2006
  %2259 = vmatpush.msra.mxu0 %v2002
  %2260 = vmatpush.msra.mxu0 %v1998
  %2261 = vmatpush.msra.mxu0 %v1994
  %2262 = vmatmul.f32.gmra.mxu0 %v1984
  %v2263 = vpop.f32.mrf.mxu0
  %v2264 = vadd.f32 %v2124, %v2263
  %2265 = vmatmul.f32.gmra.mxu0 %v1986
  %v2266 = vpop.f32.mrf.mxu0
  %v2267 = vadd.f32 %v2124, %v2266
  %2268 = vmatmul.f32.gmra.mxu0 %v1988
  %v2269 = vpop.f32.mrf.mxu0
  %v2270 = vadd.f32 %v2124, %v2269
  %2271 = vmatmul.f32.gmra.mxu0 %v1990
  %v2272 = vpop.f32.mrf.mxu0
  %v2273 = vadd.f32 %v2124, %v2272
  %2274 = vdwg.mxu0
  %2275 = vmatpush.msra.mxu0 %v2118
  %2276 = vmatpush.msra.mxu0 %v2114
  %2277 = vmatpush.msra.mxu0 %v2110
  %2278 = vmatpush.msra.mxu0 %v2106
  %2279 = vmatpush.msra.mxu0 %v2102
  %2280 = vmatpush.msra.mxu0 %v2098
  %2281 = vmatpush.msra.mxu0 %v2094
  %2282 = vmatpush.msra.mxu0 %v2090
  %2283 = vmatpush.msra.mxu0 %v2086
  %2284 = vmatpush.msra.mxu0 %v2082
  %2285 = vmatpush.msra.mxu0 %v2078
  %2286 = vmatpush.msra.mxu0 %v2074
  %2287 = vmatpush.msra.mxu0 %v2070
  %2288 = vmatpush.msra.mxu0 %v2066
  %2289 = vmatpush.msra.mxu0 %v2062
  %2290 = vmatpush.msra.mxu0 %v2058
  %2291 = vmatmul.f32.gmra.mxu0 %v1985
  %v2292 = vpop.f32.mrf.mxu0
  %v2293 = vadd.f32 %v2264, %v2292
  %2294 = vmatmul.f32.gmra.mxu0 %v1987
  %v2295 = vpop.f32.mrf.mxu0
  %v2296 = vadd.f32 %v2267, %v2295
  %2297 = vmatmul.f32.gmra.mxu0 %v1989
  %v2298 = vpop.f32.mrf.mxu0
  %v2299 = vadd.f32 %v2270, %v2298
  %2300 = vmatmul.f32.gmra.mxu0 %v1991
  %v2301 = vpop.f32.mrf.mxu0
  %v2302 = vadd.f32 %v2273, %v2301
  %2303 = vdwg.mxu0
  %2304 = vmatpush.msra.mxu0 %v2055
  %2305 = vmatpush.msra.mxu0 %v2051
  %2306 = vmatpush.msra.mxu0 %v2047
  %2307 = vmatpush.msra.mxu0 %v2043
  %2308 = vmatpush.msra.mxu0 %v2039
  %2309 = vmatpush.msra.mxu0 %v2035
  %2310 = vmatpush.msra.mxu0 %v2031
  %2311 = vmatpush.msra.mxu0 %v2027
  %2312 = vmatpush.msra.mxu0 %v2023
  %2313 = vmatpush.msra.mxu0 %v2019
  %2314 = vmatpush.msra.mxu0 %v2015
  %2315 = vmatpush.msra.mxu0 %v2011
  %2316 = vmatpush.msra.mxu0 %v2007
  %2317 = vmatpush.msra.mxu0 %v2003
  %2318 = vmatpush.msra.mxu0 %v1999
  %2319 = vmatpush.msra.mxu0 %v1995
  %2320 = vmatmul.f32.gmra.mxu0 %v1984
  %v2321 = vpop.f32.mrf.mxu0
  %v2322 = vadd.f32 %v2125, %v2321
  %2323 = vmatmul.f32.gmra.mxu0 %v1986
  %v2324 = vpop.f32.mrf.mxu0
  %v2325 = vadd.f32 %v2125, %v2324
  %2326 = vmatmul.f32.gmra.mxu0 %v1988
  %v2327 = vpop.f32.mrf.mxu0
  %v2328 = vadd.f32 %v2125, %v2327
  %2329 = vmatmul.f32.gmra.mxu0 %v1990
  %v2330 = vpop.f32.mrf.mxu0
  %v2331 = vadd.f32 %v2125, %v2330
  %2332 = vdwg.mxu0
  %2333 = vmatpush.msra.mxu0 %v2119
  %2334 = vmatpush.msra.mxu0 %v2115
  %2335 = vmatpush.msra.mxu0 %v2111
  %2336 = vmatpush.msra.mxu0 %v2107
  %2337 = vmatpush.msra.mxu0 %v2103
  %2338 = vmatpush.msra.mxu0 %v2099
  %2339 = vmatpush.msra.mxu0 %v2095
  %2340 = vmatpush.msra.mxu0 %v2091
  %2341 = vmatpush.msra.mxu0 %v2087
  %2342 = vmatpush.msra.mxu0 %v2083
  %2343 = vmatpush.msra.mxu0 %v2079
  %2344 = vmatpush.msra.mxu0 %v2075
  %2345 = vmatpush.msra.mxu0 %v2071
  %2346 = vmatpush.msra.mxu0 %v2067
  %2347 = vmatpush.msra.mxu0 %v2063
  %2348 = vmatpush.msra.mxu0 %v2059
  %2349 = vmatmul.f32.gmra.mxu0 %v1985
  %v2350 = vpop.f32.mrf.mxu0
  %v2351 = vadd.f32 %v2322, %v2350
  %2352 = vmatmul.f32.gmra.mxu0 %v1987
  %v2353 = vpop.f32.mrf.mxu0
  %v2354 = vadd.f32 %v2325, %v2353
  %2355 = vmatmul.f32.gmra.mxu0 %v1989
  %v2356 = vpop.f32.mrf.mxu0
  %v2357 = vadd.f32 %v2328, %v2356
  %2358 = vmatmul.f32.gmra.mxu0 %v1991
  %v2359 = vpop.f32.mrf.mxu0
  %v2360 = vadd.f32 %v2331, %v2359
  %2361 = vdwg.mxu0
  %2362 = vst [vmem:[%s3 + $0xa0] sm:$0xff] %v2177
  %2363 = vst [vmem:[%s3 + $0xa8] sm:$0xff] %v2235
  %2364 = vst [vmem:[%s3 + $0xb0] sm:$0xff] %v2293
  %2365 = vst [vmem:[%s3 + $0xb8] sm:$0xff] %v2351
  %2366 = vst [vmem:[%s3 + $0x160] sm:$0xff] %v2180
  %2367 = vst [vmem:[%s3 + $0x168] sm:$0xff] %v2238
  %2368 = vst [vmem:[%s3 + $0x170] sm:$0xff] %v2296
  %2369 = vst [vmem:[%s3 + $0x178] sm:$0xff] %v2354
  %2370 = vst [vmem:[%s3 + $0x220] sm:$0xff] %v2183
  %2371 = vst [vmem:[%s3 + $0x228] sm:$0xff] %v2241
  %2372 = vst [vmem:[%s3 + $0x230] sm:$0xff] %v2299
  %2373 = vst [vmem:[%s3 + $0x238] sm:$0xff] %v2357
  %2374 = vst [vmem:[%s3 + $0x2e0] sm:$0xff] %v2186
  %2375 = vst [vmem:[%s3 + $0x2e8] sm:$0xff] %v2244
  %2376 = vst [vmem:[%s3 + $0x2f0] sm:$0xff] %v2302
  %2377 = vst [vmem:[%s3 + $0x2f8] sm:$0xff] %v2360
  // Predicated region
  $region14: #{linear_tokenizer_forward.1} parent=0 // pred_check
    _
  $region15: #{linear_tokenizer_forward.1} parent=0 // pred_check_branch
    %2379 = sbr.rel (0) target = $region17
  $region16: #{linear_tokenizer_forward.1} parent=0 // pred_region
    _
  $region17: #{linear_tokenizer_forward.1} parent=0 // pred_fallthru
    _
  // Predicated region
  $region18: #{linear_tokenizer_forward.1} parent=0 // pred_check
    _
  $region19: #{linear_tokenizer_forward.1} parent=0 // pred_check_branch
    %2381 = sbr.rel (0) target = $region21
  $region20: #{linear_tokenizer_forward.1} parent=0 // pred_region
    _
  $region21: #{linear_tokenizer_forward.1} parent=0 // pred_fallthru
    _

</llo_original>
